<compile_context>
chip_gen: v7x
topology: tpu7x:2x2x1
jax: 0.10.0
libtpu: 0.0.40
codegen_flags: <defaults>
</compile_context>

<pallas_src>
import functools

import jax
import jax.numpy as jnp
from jax import lax
from jax.experimental import pallas as pl
from jax.experimental.pallas import tpu as pltpu

NEG_SLOPE = 0.01   # nn.LeakyReLU(negative_slope=0.01)
LN_EPS = 1e-5      # nn.LayerNorm default eps
NEG_BIG = -1e30    # additive mask value (finite -> no inf-inf NaNs)


def _smha_kernel(x_ref, wqkv_ref, wo_ref, bias_ref, gb_ref, out_ref, *, B, H):
    """Fused SMHA_classifier forward.

    x_ref:    (N, E)   tokens, rows l-major (r = l*B + b)
    wqkv_ref: (3E, E)  [wq*scale; wk; wv]   (PyTorch out x in layout)
    wo_ref:   (E, E)   out_proj weight      (PyTorch out x in layout)
    bias_ref: (4E, 1)  [bq*scale; bk; bv; bo]
    gb_ref:   (2E, N)  [gamma^T tiled; beta^T tiled]  (feature-major, per column)
    out_ref:  (1, N)   mean-over-E of LeakyReLU(LN(attn_out)), column r = l*B + b
    """
    N, E = x_ref.shape
    Dh = E // H

    x = x_ref[...]                         # (N, E)
    bias = bias_ref[...]                   # (4E, 1)
    gb = gb_ref[...]                       # (2E, N)

    # ---- fused QKV projection: ONE MXU matmul, feature-major (3E, N) output so
    # the per-head split below is a tile-exact sublane reshape (Dh == 8).
    qkv = jnp.einsum('fe,re->fr', wqkv_ref[...], x,
                     preferred_element_type=jnp.float32)           # (3E, N)
    qkv = qkv + bias[0:3 * E]                                      # (3E, 1) broadcast

    heads = qkv.reshape(3 * H, Dh, N)      # sublane split in exact multiples of 8
    q_fm = heads[0:H]                      # (H, Dh, N) feature-major
    k_fm = heads[H:2 * H]
    v_fm = heads[2 * H:3 * H]

    # Only q needs token-major orientation for the canonical batched matmul
    # (4 small XLU tile transposes; k/v stay feature-major).
    q_rm = jnp.swapaxes(q_fm, 1, 2)        # (H, N, Dh)

    # ---- in-kernel masks from iota (no O(N^2) HBM inputs).
    rows = lax.broadcasted_iota(jnp.int32, (N, N), 0)
    cols = lax.broadcasted_iota(jnp.int32, (N, N), 1)
    if (B & (B - 1)) == 0:                 # power-of-two B: shifts/ands only
        shift = B.bit_length() - 1
        r_b, c_b = rows & (B - 1), cols & (B - 1)
        r_l, c_l = rows >> shift, cols >> shift
    else:
        r_b, c_b = rows % B, cols % B
        r_l, c_l = rows // B, cols // B
    # attention batch-compatibility mask: row r only attends within its batch b.
    attn_mask = jnp.where(r_b == c_b, 0.0, NEG_BIG).astype(jnp.float32)    # (N, N)
    # LayerNorm group-average matrix: columns sharing the same position l.
    ln_g = jnp.where(r_l == c_l, 1.0 / (B * E), 0.0).astype(jnp.float32)   # (N, N)

    # ---- attention, batched over heads (H batched matmuls on full-width tiles).
    s = jnp.einsum('hrd,hdm->hrm', q_rm, k_fm,
                   preferred_element_type=jnp.float32)             # (H, N, N)
    s = s + attn_mask                                              # broadcast over H
    s = s - jnp.max(s, axis=-1, keepdims=True)
    p = jnp.exp(s)
    p = p * pl.reciprocal(jnp.sum(p, axis=-1, keepdims=True), approx=False)
    # PV with feature-major output: contract over keys, no transposes needed.
    o_fm = jnp.einsum('hdm,hrm->hdr', v_fm, p,
                      preferred_element_type=jnp.float32)          # (H, Dh, N)

    # ---- out_proj: flatten heads (tile-exact merge) -> ONE (E,E)@(E,N) matmul.
    o_flat = o_fm.reshape(E, N)                                    # feature index h*Dh+d
    h_t = jnp.dot(wo_ref[...], o_flat,
                  preferred_element_type=jnp.float32)              # (E, N)
    h_t = h_t + bias[3 * E:4 * E]                                  # bo, (E, 1) broadcast

    # ---- LayerNorm over (B, E) per position l, feature-major.
    # ln_g averages over same-l columns; the sublane sum adds the over-E part.
    mu = jnp.sum(jnp.dot(h_t, ln_g, preferred_element_type=jnp.float32),
                 axis=0, keepdims=True)                            # (1, N) group mean
    d = h_t - mu
    var = jnp.sum(jnp.dot(d * d, ln_g, preferred_element_type=jnp.float32),
                  axis=0, keepdims=True)                           # (1, N) biased var
    hn = d * lax.rsqrt(var + LN_EPS)
    hn = hn * gb[0:E] + gb[E:2 * E]                                # per-(b, e) affine

    # ---- LeakyReLU, then mean over E: one lane-dense (1, N) row store.
    act = jnp.where(hn >= 0.0, hn, NEG_SLOPE * hn)
    out_ref[...] = jnp.sum(act, axis=0, keepdims=True) * (1.0 / E)


def prepare_params(params, L, B, E, num_heads):
    """One-time parameter packing (hoisted out of the per-call path)."""
    H = num_heads
    Dh = E // H
    scale = 1.0 / float(Dh) ** 0.5
    f32 = jnp.float32

    wqkv = jnp.concatenate([params['wq'] * scale, params['wk'], params['wv']],
                           axis=0).astype(f32)                              # (3E, E)
    bias = jnp.concatenate([params['bq'] * scale, params['bk'],
                            params['bv'], params['bo']]
                           ).reshape(4 * E, 1).astype(f32)                  # (4E, 1)
    wo = params['wo'].astype(f32)                                           # (E, E)
    # gamma/beta in feature-major per-column form: column r = l*B + b uses row b.
    gamma_fm = jnp.tile(params['gamma'].T, (1, L)).astype(f32)              # (E, N)
    beta_fm = jnp.tile(params['beta'].T, (1, L)).astype(f32)                # (E, N)
    gb = jnp.concatenate([gamma_fm, beta_fm], axis=0)                       # (2E, N)
    return {'wqkv': wqkv, 'wo': wo, 'bias': bias, 'gb': gb}


@functools.partial(jax.jit, static_argnums=(2,))
def smha_classifier_forward(x, packed, num_heads):
    """x: (L, B, E) as in the PyTorch module. Returns (L, B)."""
    L, B, E = x.shape
    assert E % num_heads == 0
    H = num_heads
    Dh = E // H
    N = L * B
    f32 = jnp.float32

    xf = x.reshape(N, E).astype(f32)       # contiguous reshape, rows r = l*B + b

    flops = (2 * N * E * 3 * E             # fused QKV projection
             + 2 * H * N * N * Dh * 2      # scores + PV
             + 2 * N * E * E               # fused out_proj
             + 2 * 2 * N * N * E)          # LayerNorm group matmuls
    bytes_accessed = 4 * (xf.size + packed['wqkv'].size + packed['wo'].size
                          + packed['bias'].size + packed['gb'].size + N)

    vmem = pl.BlockSpec(memory_space=pltpu.MemorySpace.VMEM)
    kernel = functools.partial(_smha_kernel, B=B, H=H)
    out = pl.pallas_call(
        kernel,
        out_shape=jax.ShapeDtypeStruct((1, N), f32),
        in_specs=[vmem] * 5,
        out_specs=vmem,
        cost_estimate=pl.CostEstimate(
            flops=flops,
            transcendentals=H * N * N + N,
            bytes_accessed=bytes_accessed),
    )(xf, packed['wqkv'], packed['wo'], packed['bias'], packed['gb'])

    return out.reshape(L, B)               # (1, N) row is l-major: r = l*B + b


def init_params(key, B, E):
    """Deterministic synthetic parameters matching nn.MultiheadAttention /
    nn.LayerNorm((B, E)) shapes (in_proj split into wq/wk/wv)."""
    ks = jax.random.split(key, 10)
    bound = (6.0 / (2 * E)) ** 0.5  # xavier_uniform-style
    u = lambda k, shape, b: jax.random.uniform(k, shape, jnp.float32, -b, b)
    return {
        'wq': u(ks[0], (E, E), bound),
        'wk': u(ks[1], (E, E), bound),
        'wv': u(ks[2], (E, E), bound),
        'wo': u(ks[3], (E, E), 1.0 / (E ** 0.5)),
        'bq': 0.02 * jax.random.normal(ks[4], (E,), jnp.float32),
        'bk': 0.02 * jax.random.normal(ks[5], (E,), jnp.float32),
        'bv': 0.02 * jax.random.normal(ks[6], (E,), jnp.float32),
        'bo': 0.02 * jax.random.normal(ks[7], (E,), jnp.float32),
        # nn.LayerNorm((B, E)) affine; randomized so the affine path is tested.
        'gamma': 1.0 + 0.1 * jax.random.normal(ks[8], (B, E), jnp.float32),
        'beta': 0.05 * jax.random.normal(ks[9], (B, E), jnp.float32),
    }


def reference_forward(x, params, num_heads):
    """Pure-JAX reference mirroring PyTorch semantics (x: (L, B, E))."""
    L, B, E = x.shape
    H = num_heads
    Dh = E // H
    hi = jax.lax.Precision.HIGHEST

    def proj(w, b):
        return jnp.einsum('lbe,fe->lbf', x, w, precision=hi) + b

    q = proj(params['wq'], params['bq'])
    k = proj(params['wk'], params['bk'])
    v = proj(params['wv'], params['bv'])

    def heads(t):
        return t.reshape(L, B, H, Dh).transpose(1, 2, 0, 3)   # (B, H, L, Dh)

    qh, kh, vh = heads(q), heads(k), heads(v)
    s = jnp.einsum('bhld,bhmd->bhlm', qh * (Dh ** -0.5), kh, precision=hi)
    a = jax.nn.softmax(s, axis=-1)
    o = jnp.einsum('bhlm,bhmd->bhld', a, vh, precision=hi)
    o = o.transpose(2, 0, 1, 3).reshape(L, B, E)
    h = jnp.einsum('lbe,fe->lbf', o, params['wo'], precision=hi) + params['bo']

    mu = h.mean(axis=(1, 2), keepdims=True)
    var = ((h - mu) ** 2).mean(axis=(1, 2), keepdims=True)    # biased variance
    hn = (h - mu) / jnp.sqrt(var + LN_EPS) * params['gamma'] + params['beta']
    act = jnp.where(hn >= 0.0, hn, NEG_SLOPE * hn)
    return act.mean(axis=2)                                   # (L, B)


if __name__ == "__main__":
    # size = (B, E) = (4, 32), nhead = 4, x: (L, B, E) = (8, 4, 32)
    L, B, E, H = 8, 4, 32, 4
    key = jax.random.PRNGKey(0)
    kx, kp = jax.random.split(key)
    x = jax.random.normal(kx, (L, B, E), dtype=jnp.float32)
    params = init_params(kp, B, E)

    packed = prepare_params(params, L, B, E, H)   # one-time prep, off the hot path
    out = smha_classifier_forward(x, packed, H)
    out = jax.block_until_ready(out)

    ref = reference_forward(x, params, H)
    assert out.shape == (L, B), out.shape
    if not jnp.allclose(out, ref, atol=1e-4, rtol=1e-4):
        raise AssertionError(
            f"mismatch: max abs err = {jnp.max(jnp.abs(out - ref))}")
    # NOTE: x.requires_grad_(True) and the returned attention weights affect
    # nothing in the forward output and are intentionally omitted.
    print("KERNEL_OK")
</pallas_src>

<mosaic_0001>
module attributes {stable_mosaic.version = 11 : i64} {
  func.func @_smha_kernel(%arg0: memref<32x32xf32, #tpu.memory_space<vmem>>, %arg1: memref<96x32xf32, #tpu.memory_space<vmem>>, %arg2: memref<32x32xf32, #tpu.memory_space<vmem>>, %arg3: memref<128x1xf32, #tpu.memory_space<vmem>>, %arg4: memref<64x32xf32, #tpu.memory_space<vmem>>, %arg5: memref<1x32xf32, #tpu.memory_space<vmem>>) attributes {dimension_semantics = [], scalar_prefetch = 0 : i64, scratch_operands = 0 : i64, tpu.core_type = #tpu.core_type<tc>} {
    %c0 = arith.constant 0 : index
    %c0_0 = arith.constant 0 : index
    %0 = vector.load %arg0[%c0, %c0_0] : memref<32x32xf32, #tpu.memory_space<vmem>>, vector<32x32xf32>
    %c0_1 = arith.constant 0 : index
    %c0_2 = arith.constant 0 : index
    %1 = vector.load %arg3[%c0_1, %c0_2] : memref<128x1xf32, #tpu.memory_space<vmem>>, vector<128x1xf32>
    %c0_3 = arith.constant 0 : index
    %c0_4 = arith.constant 0 : index
    %2 = vector.load %arg4[%c0_3, %c0_4] : memref<64x32xf32, #tpu.memory_space<vmem>>, vector<64x32xf32>
    %c0_5 = arith.constant 0 : index
    %c0_6 = arith.constant 0 : index
    %3 = vector.load %arg1[%c0_5, %c0_6] : memref<96x32xf32, #tpu.memory_space<vmem>>, vector<96x32xf32>
    "tpu.trace_start"() <{level = 10 : i32, message = "fe,re->fr"}> : () -> ()
    %cst = arith.constant dense<0.000000e+00> : vector<96x32xf32>
    %4 = tpu.matmul %3, %0, %cst {dimension_numbers = #tpu.dot_dimension_numbers<[1], [1], [0], [0], [0, 0, 1, 0], [], []>} : vector<96x32xf32>, vector<32x32xf32>, vector<96x32xf32> -> vector<96x32xf32>
    "tpu.trace_stop"() : () -> ()
    %5 = vector.extract_strided_slice %1 {offsets = [0, 0], sizes = [96, 1], strides = [1, 1]} : vector<128x1xf32> to vector<96x1xf32>
    %6 = vector.broadcast %5 : vector<96x1xf32> to vector<96x32xf32>
    %7 = arith.addf %4, %6 : vector<96x32xf32>
    %8 = vector.shape_cast %7 : vector<96x32xf32> to vector<12x8x32xf32>
    %9 = vector.extract_strided_slice %8 {offsets = [0, 0, 0], sizes = [4, 8, 32], strides = [1, 1, 1]} : vector<12x8x32xf32> to vector<4x8x32xf32>
    %10 = vector.extract_strided_slice %8 {offsets = [4, 0, 0], sizes = [4, 8, 32], strides = [1, 1, 1]} : vector<12x8x32xf32> to vector<4x8x32xf32>
    %11 = vector.extract_strided_slice %8 {offsets = [8, 0, 0], sizes = [4, 8, 32], strides = [1, 1, 1]} : vector<12x8x32xf32> to vector<4x8x32xf32>
    %12 = tpu.transpose %9, [0, 2, 1] : vector<4x8x32xf32> -> vector<4x32x8xf32>
    %13 = tpu.iota {dimensions = array<i32: 0>} : vector<32x32xi32>
    %14 = tpu.iota {dimensions = array<i32: 1>} : vector<32x32xi32>
    %c3_i32 = arith.constant 3 : i32
    %15 = vector.broadcast %c3_i32 : i32 to vector<32x32xi32>
    %16 = arith.andi %13, %15 : vector<32x32xi32>
    %c3_i32_7 = arith.constant 3 : i32
    %17 = vector.broadcast %c3_i32_7 : i32 to vector<32x32xi32>
    %18 = arith.andi %14, %17 : vector<32x32xi32>
    %c2_i32 = arith.constant 2 : i32
    %19 = vector.broadcast %c2_i32 : i32 to vector<32x32xi32>
    %20 = arith.shrsi %13, %19 : vector<32x32xi32>
    %c2_i32_8 = arith.constant 2 : i32
    %21 = vector.broadcast %c2_i32_8 : i32 to vector<32x32xi32>
    %22 = arith.shrsi %14, %21 : vector<32x32xi32>
    %23 = arith.cmpi eq, %16, %18 : vector<32x32xi32>
    %cst_9 = arith.constant 0.000000e+00 : f32
    %cst_10 = arith.constant -1.000000e+30 : f32
    %24 = vector.broadcast %cst_9 : f32 to vector<32x32xf32>
    %25 = vector.broadcast %cst_10 : f32 to vector<32x32xf32>
    %26 = arith.select %23, %24, %25 : vector<32x32xi1>, vector<32x32xf32>
    %27 = arith.cmpi eq, %20, %22 : vector<32x32xi32>
    %cst_11 = arith.constant 7.812500e-03 : f32
    %cst_12 = arith.constant 0.000000e+00 : f32
    %28 = vector.broadcast %cst_11 : f32 to vector<32x32xf32>
    %29 = vector.broadcast %cst_12 : f32 to vector<32x32xf32>
    %30 = arith.select %27, %28, %29 : vector<32x32xi1>, vector<32x32xf32>
    "tpu.trace_start"() <{level = 10 : i32, message = "hrd,hdm->hrm"}> : () -> ()
    %cst_13 = arith.constant dense<0.000000e+00> : vector<4x32x32xf32>
    %31 = tpu.matmul %12, %10, %cst_13 {dimension_numbers = #tpu.dot_dimension_numbers<[2], [1], [1], [2], [0, 0, 0, 1, 1, 2], [0], [0]>} : vector<4x32x8xf32>, vector<4x8x32xf32>, vector<4x32x32xf32> -> vector<4x32x32xf32>
    "tpu.trace_stop"() : () -> ()
    %32 = vector.shape_cast %26 : vector<32x32xf32> to vector<1x32x32xf32>
    %33 = vector.broadcast %32 : vector<1x32x32xf32> to vector<4x32x32xf32>
    %34 = arith.addf %31, %33 : vector<4x32x32xf32>
    %cst_14 = arith.constant dense<0xFF800000> : vector<4x32xf32>
    %35 = vector.multi_reduction <maximumf>, %34, %cst_14 [2] : vector<4x32x32xf32> to vector<4x32xf32>
    %36 = vector.shape_cast %35 : vector<4x32xf32> to vector<4x32x1xf32>
    %37 = vector.broadcast %36 : vector<4x32x1xf32> to vector<4x32x32xf32>
    %38 = arith.subf %34, %37 : vector<4x32x32xf32>
    %39 = math.exp %38 : vector<4x32x32xf32>
    %cst_15 = arith.constant dense<0.000000e+00> : vector<4x32xf32>
    %40 = vector.multi_reduction <add>, %39, %cst_15 [2] : vector<4x32x32xf32> to vector<4x32xf32>
    %41 = vector.shape_cast %40 : vector<4x32xf32> to vector<4x32x1xf32>
    %42 = tpu.reciprocal %41 : vector<4x32x1xf32> -> vector<4x32x1xf32>
    %43 = vector.broadcast %42 : vector<4x32x1xf32> to vector<4x32x32xf32>
    %44 = arith.mulf %39, %43 : vector<4x32x32xf32>
    "tpu.trace_start"() <{level = 10 : i32, message = "hdm,hrm->hdr"}> : () -> ()
    %cst_16 = arith.constant dense<0.000000e+00> : vector<4x8x32xf32>
    %45 = tpu.matmul %11, %44, %cst_16 {dimension_numbers = #tpu.dot_dimension_numbers<[2], [2], [1], [1], [0, 0, 0, 1, 1, 1], [0], [0]>} : vector<4x8x32xf32>, vector<4x32x32xf32>, vector<4x8x32xf32> -> vector<4x8x32xf32>
    "tpu.trace_stop"() : () -> ()
    %46 = vector.shape_cast %45 : vector<4x8x32xf32> to vector<32x32xf32>
    %c0_17 = arith.constant 0 : index
    %c0_18 = arith.constant 0 : index
    %47 = vector.load %arg2[%c0_17, %c0_18] : memref<32x32xf32, #tpu.memory_space<vmem>>, vector<32x32xf32>
    %cst_19 = arith.constant dense<0.000000e+00> : vector<32x32xf32>
    %48 = tpu.matmul %47, %46, %cst_19 {dimension_numbers = #tpu.dot_dimension_numbers<[1], [0], [0], [1], [0, 0, 1, 1], [], []>} : vector<32x32xf32>, vector<32x32xf32>, vector<32x32xf32> -> vector<32x32xf32>
    %49 = vector.extract_strided_slice %1 {offsets = [96, 0], sizes = [32, 1], strides = [1, 1]} : vector<128x1xf32> to vector<32x1xf32>
    %50 = vector.broadcast %49 : vector<32x1xf32> to vector<32x32xf32>
    %51 = arith.addf %48, %50 : vector<32x32xf32>
    %cst_20 = arith.constant dense<0.000000e+00> : vector<32x32xf32>
    %52 = tpu.matmul %51, %30, %cst_20 {dimension_numbers = #tpu.dot_dimension_numbers<[1], [0], [0], [1], [0, 0, 1, 1], [], []>} : vector<32x32xf32>, vector<32x32xf32>, vector<32x32xf32> -> vector<32x32xf32>
    %cst_21 = arith.constant dense<0.000000e+00> : vector<32xf32>
    %53 = vector.multi_reduction <add>, %52, %cst_21 [0] : vector<32x32xf32> to vector<32xf32>
    %54 = vector.shape_cast %53 : vector<32xf32> to vector<1x32xf32>
    %55 = vector.broadcast %54 : vector<1x32xf32> to vector<32x32xf32>
    %56 = arith.subf %51, %55 : vector<32x32xf32>
    %57 = arith.mulf %56, %56 : vector<32x32xf32>
    %cst_22 = arith.constant dense<0.000000e+00> : vector<32x32xf32>
    %58 = tpu.matmul %57, %30, %cst_22 {dimension_numbers = #tpu.dot_dimension_numbers<[1], [0], [0], [1], [0, 0, 1, 1], [], []>} : vector<32x32xf32>, vector<32x32xf32>, vector<32x32xf32> -> vector<32x32xf32>
    %cst_23 = arith.constant dense<0.000000e+00> : vector<32xf32>
    %59 = vector.multi_reduction <add>, %58, %cst_23 [0] : vector<32x32xf32> to vector<32xf32>
    %60 = vector.shape_cast %59 : vector<32xf32> to vector<1x32xf32>
    %cst_24 = arith.constant 9.99999974E-6 : f32
    %61 = vector.broadcast %cst_24 : f32 to vector<1x32xf32>
    %62 = arith.addf %60, %61 : vector<1x32xf32>
    %63 = math.rsqrt %62 : vector<1x32xf32>
    %64 = vector.broadcast %63 : vector<1x32xf32> to vector<32x32xf32>
    %65 = arith.mulf %56, %64 : vector<32x32xf32>
    %66 = vector.extract_strided_slice %2 {offsets = [0, 0], sizes = [32, 32], strides = [1, 1]} : vector<64x32xf32> to vector<32x32xf32>
    %67 = arith.mulf %65, %66 : vector<32x32xf32>
    %68 = vector.extract_strided_slice %2 {offsets = [32, 0], sizes = [32, 32], strides = [1, 1]} : vector<64x32xf32> to vector<32x32xf32>
    %69 = arith.addf %67, %68 : vector<32x32xf32>
    %cst_25 = arith.constant 0.000000e+00 : f32
    %70 = vector.broadcast %cst_25 : f32 to vector<32x32xf32>
    %71 = arith.cmpf oge, %69, %70 : vector<32x32xf32>
    %cst_26 = arith.constant 0.00999999977 : f32
    %72 = vector.broadcast %cst_26 : f32 to vector<32x32xf32>
    %73 = arith.mulf %72, %69 : vector<32x32xf32>
    %74 = arith.select %71, %69, %73 : vector<32x32xi1>, vector<32x32xf32>
    %cst_27 = arith.constant dense<0.000000e+00> : vector<32xf32>
    %75 = vector.multi_reduction <add>, %74, %cst_27 [0] : vector<32x32xf32> to vector<32xf32>
    %76 = vector.shape_cast %75 : vector<32xf32> to vector<1x32xf32>
    %cst_28 = arith.constant 3.125000e-02 : f32
    %77 = vector.broadcast %cst_28 : f32 to vector<1x32xf32>
    %78 = arith.mulf %76, %77 : vector<1x32xf32>
    %c0_29 = arith.constant 0 : index
    %c0_30 = arith.constant 0 : index
    %79 = vector.load %arg5[%c0_29, %c0_30] : memref<1x32xf32, #tpu.memory_space<vmem>>, vector<1x32xf32>
    tpu.vector_store %arg5[%c0_29, %c0_30], %78 {strides = array<i32>} : memref<1x32xf32, #tpu.memory_space<vmem>>, vector<1x32xf32>,
    return
  }
}

</mosaic_0001>

<llo_original>
// kernel: smha_classifier_forward.1
$region0: #{smha_classifier_forward.1}
  #allocation0 [shape = 'u32[]', space=smem, size = 0x4, offset = 0x4, fixed_abs, tag = 'smem constant byte address 0x4 - core index']
  #allocation1 [shape = 'u32[144,128]{1,0:T(1,128)}', space=vmem, size = 0x12000, scoped, tag = 'internal scratch']
  %s0 = inlined_call_operand.vmem [shape: f32[32,32], index: 0, kind: input, shape index: {}]
  %s1 = inlined_call_operand.vmem [shape: f32[96,32], index: 1, kind: input, shape index: {}]
  %s2 = inlined_call_operand.vmem [shape: f32[32,32], index: 2, kind: input, shape index: {}]
  %s3 = inlined_call_operand.vmem [shape: f32[128,1], index: 3, kind: input, shape index: {}]
  %s4 = inlined_call_operand.vmem [shape: f32[64,32], index: 4, kind: input, shape index: {}]
  %s5 = inlined_call_operand.vmem [shape: f32[1,32], index: 5, kind: output, shape index: {}]
  %s6 = sld [smem:[#allocation0]]
  $region30: #{smha_classifier_forward.1} parent=0
    _
  %s8 = ssub.s32 1, %s6
  %s9 = scalar_select 0, %s8, %s6
  // Predicated region
  $region2: #{smha_classifier_forward.1} parent=0 // pred_check
    _
  $region3: #{smha_classifier_forward.1} parent=0 // pred_check_branch
    %11 = sbr.rel (0) target = $region5
  $region4: #{smha_classifier_forward.1} parent=0 // pred_region
    _
  $region5: #{smha_classifier_forward.1} parent=0 // pred_fallthru
    _
  // Predicated region
  $region6: #{smha_classifier_forward.1} parent=0 // pred_check
    _
  $region7: #{smha_classifier_forward.1} parent=0 // pred_check_branch
    %13 = sbr.rel (0) target = $region9
  $region8: #{smha_classifier_forward.1} parent=0 // pred_region
    _
  $region9: #{smha_classifier_forward.1} parent=0 // pred_fallthru
    _
  // Predicated region
  $region10: #{smha_classifier_forward.1} parent=0 // pred_check
    _
  $region11: #{smha_classifier_forward.1} parent=0 // pred_check_branch
    %15 = sbr.rel (0) target = $region13
  $region12: #{smha_classifier_forward.1} parent=0 // pred_region
    _
  $region13: #{smha_classifier_forward.1} parent=0 // pred_fallthru
    _
  // Predicated region
  $region14: #{smha_classifier_forward.1} parent=0 // pred_check
    _
  $region15: #{smha_classifier_forward.1} parent=0 // pred_check_branch
    %17 = sbr.rel (0) target = $region17
  $region16: #{smha_classifier_forward.1} parent=0 // pred_region
    _
  $region17: #{smha_classifier_forward.1} parent=0 // pred_fallthru
    _
  // Predicated region
  $region18: #{smha_classifier_forward.1} parent=0 // pred_check
    _
  $region19: #{smha_classifier_forward.1} parent=0 // pred_check_branch
    %19 = sbr.rel (0) target = $region21
  $region20: #{smha_classifier_forward.1} parent=0 // pred_region
    _
  $region21: #{smha_classifier_forward.1} parent=0 // pred_fallthru
    _
  %v20 = vld [vmem:[%s0] sm:$0xff]
  %v21 = vld [vmem:[%s0 + $0x8] sm:$0xff]
  %v22 = vld [vmem:[%s0 + $0x10] sm:$0xff]
  %v23 = vld [vmem:[%s0 + $0x18] sm:$0xff]
  %v24 = vld [vmem:[%s3] sm:$0xff]
  %v25 = vld [vmem:[%s3 + $0x8] sm:$0xff]
  %v26 = vld [vmem:[%s3 + $0x10] sm:$0xff]
  %v27 = vld [vmem:[%s3 + $0x18] sm:$0xff]
  %v28 = vld [vmem:[%s3 + $0x20] sm:$0xff]
  %v29 = vld [vmem:[%s3 + $0x28] sm:$0xff]
  %v30 = vld [vmem:[%s3 + $0x30] sm:$0xff]
  %v31 = vld [vmem:[%s3 + $0x38] sm:$0xff]
  %v32 = vld [vmem:[%s3 + $0x40] sm:$0xff]
  %v33 = vld [vmem:[%s3 + $0x48] sm:$0xff]
  %v34 = vld [vmem:[%s3 + $0x50] sm:$0xff]
  %v35 = vld [vmem:[%s3 + $0x58] sm:$0xff]
  %v36 = vld [vmem:[%s3 + $0x60] sm:$0xff]
  %v37 = vld [vmem:[%s3 + $0x68] sm:$0xff]
  %v38 = vld [vmem:[%s3 + $0x70] sm:$0xff]
  %v39 = vld [vmem:[%s3 + $0x78] sm:$0xff]
  %v40 = vld [vmem:[%s4] sm:$0xff]
  %v41 = vld [vmem:[%s4 + $0x8] sm:$0xff]
  %v42 = vld [vmem:[%s4 + $0x10] sm:$0xff]
  %v43 = vld [vmem:[%s4 + $0x18] sm:$0xff]
  %v44 = vld [vmem:[%s4 + $0x20] sm:$0xff]
  %v45 = vld [vmem:[%s4 + $0x28] sm:$0xff]
  %v46 = vld [vmem:[%s4 + $0x30] sm:$0xff]
  %v47 = vld [vmem:[%s4 + $0x38] sm:$0xff]
  %v48 = vld [vmem:[%s1] sm:$0xff]
  %v49 = vld [vmem:[%s1 + $0x8] sm:$0xff]
  %v50 = vld [vmem:[%s1 + $0x10] sm:$0xff]
  %v51 = vld [vmem:[%s1 + $0x18] sm:$0xff]
  %v52 = vld [vmem:[%s1 + $0x20] sm:$0xff]
  %v53 = vld [vmem:[%s1 + $0x28] sm:$0xff]
  %v54 = vld [vmem:[%s1 + $0x30] sm:$0xff]
  %v55 = vld [vmem:[%s1 + $0x38] sm:$0xff]
  %v56 = vld [vmem:[%s1 + $0x40] sm:$0xff]
  %v57 = vld [vmem:[%s1 + $0x48] sm:$0xff]
  %v58 = vld [vmem:[%s1 + $0x50] sm:$0xff]
  %v59 = vld [vmem:[%s1 + $0x58] sm:$0xff]
  %61 = vset.pattern.permute.xlu0 0
  %62 = vperm.xlu0 %61, %v24
  %v63 = vpop.permute.xlu0 %62
  %66 = vset.pattern.permute.xlu0 0
  %67 = vperm.xlu0 %66, %v25
  %v68 = vpop.permute.xlu0 %67
  %71 = vset.pattern.permute.xlu0 0
  %72 = vperm.xlu0 %71, %v26
  %v73 = vpop.permute.xlu0 %72
  %76 = vset.pattern.permute.xlu0 0
  %77 = vperm.xlu0 %76, %v27
  %v78 = vpop.permute.xlu0 %77
  %81 = vset.pattern.permute.xlu0 0
  %82 = vperm.xlu0 %81, %v28
  %v83 = vpop.permute.xlu0 %82
  %86 = vset.pattern.permute.xlu0 0
  %87 = vperm.xlu0 %86, %v29
  %v88 = vpop.permute.xlu0 %87
  %91 = vset.pattern.permute.xlu0 0
  %92 = vperm.xlu0 %91, %v30
  %v93 = vpop.permute.xlu0 %92
  %96 = vset.pattern.permute.xlu0 0
  %97 = vperm.xlu0 %96, %v31
  %v98 = vpop.permute.xlu0 %97
  %101 = vset.pattern.permute.xlu0 0
  %102 = vperm.xlu0 %101, %v32
  %v103 = vpop.permute.xlu0 %102
  %106 = vset.pattern.permute.xlu0 0
  %107 = vperm.xlu0 %106, %v33
  %v108 = vpop.permute.xlu0 %107
  %111 = vset.pattern.permute.xlu0 0
  %112 = vperm.xlu0 %111, %v34
  %v113 = vpop.permute.xlu0 %112
  %116 = vset.pattern.permute.xlu0 0
  %117 = vperm.xlu0 %116, %v35
  %v118 = vpop.permute.xlu0 %117
  %vm120 = vcmask 261120
  %v122 = vsel %vm120, %v48, 0
  %v125 = vsel %vm120, %v49, 0
  %v128 = vsel %vm120, %v50, 0
  %v131 = vsel %vm120, %v51, 0
  %v134 = vsel %vm120, %v52, 0
  %v137 = vsel %vm120, %v53, 0
  %v140 = vsel %vm120, %v54, 0
  %v143 = vsel %vm120, %v55, 0
  %v146 = vsel %vm120, %v56, 0
  %v149 = vsel %vm120, %v57, 0
  %v152 = vsel %vm120, %v58, 0
  %v155 = vsel %vm120, %v59, 0
  %v158 = vsel %vm120, %v20, 0
  %v161 = vsel %vm120, %v21, 0
  %v164 = vsel %vm120, %v22, 0
  %v167 = vsel %vm120, %v23, 0
  %169 = vmatprep.subr.mxu0 0.0
  %170 = vmatpush1.xpose.msra.mxu0 %v158
  %171 = vmatprep.subr.mxu0 0.0
  %172 = vmatpush1.xpose.msra.mxu0 %v161
  %173 = vmatprep.subr.mxu0 0.0
  %174 = vmatpush1.xpose.msra.mxu0 %v164
  %175 = vmatprep.subr.mxu0 0.0
  %176 = vmatpush1.xpose.msra.mxu0 %v167
  %177 = vmatprep.subr.mxu0 0.0
  %178 = vmatpush1.xpose.msra.mxu0 0.0
  %179 = vmatprep.subr.mxu0 0.0
  %180 = vmatpush1.xpose.msra.mxu0 0.0
  %181 = vmatprep.subr.mxu0 0.0
  %182 = vmatpush1.xpose.msra.mxu0 0.0
  %183 = vmatprep.subr.mxu0 0.0
  %184 = vmatpush1.xpose.msra.mxu0 0.0
  %185 = vmatprep.subr.mxu0 0.0
  %186 = vmatpush1.xpose.msra.mxu0 0.0
  %187 = vmatprep.subr.mxu0 0.0
  %188 = vmatpush1.xpose.msra.mxu0 0.0
  %189 = vmatprep.subr.mxu0 0.0
  %190 = vmatpush1.xpose.msra.mxu0 0.0
  %191 = vmatprep.subr.mxu0 0.0
  %192 = vmatpush1.xpose.msra.mxu0 0.0
  %193 = vmatprep.subr.mxu0 0.0
  %194 = vmatpush1.xpose.msra.mxu0 0.0
  %195 = vmatprep.subr.mxu0 0.0
  %196 = vmatpush1.xpose.msra.mxu0 0.0
  %197 = vmatprep.subr.mxu0 0.0
  %198 = vmatpush1.xpose.msra.mxu0 0.0
  %199 = vmatprep.subr.mxu0 0.0
  %200 = vmatpush1.xpose.msra.mxu0 0.0
  %201 = vmatprep.subr.mxu0 0.0
  %202 = vmatpush1.xpose.msra.mxu0 0.0
  %203 = vmatprep.subr.mxu0 0.0
  %204 = vmatpush1.xpose.msra.mxu0 0.0
  %205 = vmatprep.subr.mxu0 0.0
  %206 = vmatpush1.xpose.msra.mxu0 0.0
  %207 = vmatprep.subr.mxu0 0.0
  %208 = vmatpush1.xpose.msra.mxu0 0.0
  %209 = vmatprep.subr.mxu0 0.0
  %210 = vmatpush1.xpose.msra.mxu0 0.0
  %211 = vmatprep.subr.mxu0 0.0
  %212 = vmatpush1.xpose.msra.mxu0 0.0
  %213 = vmatprep.subr.mxu0 0.0
  %214 = vmatpush1.xpose.msra.mxu0 0.0
  %215 = vmatprep.subr.mxu0 0.0
  %216 = vmatpush1.xpose.msra.mxu0 0.0
  %217 = vmatprep.subr.mxu0 0.0
  %218 = vmatpush1.xpose.msra.mxu0 0.0
  %219 = vmatprep.subr.mxu0 0.0
  %220 = vmatpush1.xpose.msra.mxu0 0.0
  %221 = vmatprep.subr.mxu0 0.0
  %222 = vmatpush1.xpose.msra.mxu0 0.0
  %223 = vmatprep.subr.mxu0 0.0
  %224 = vmatpush1.xpose.msra.mxu0 0.0
  %225 = vmatprep.subr.mxu0 0.0
  %226 = vmatpush1.xpose.msra.mxu0 0.0
  %227 = vmatprep.subr.mxu0 0.0
  %228 = vmatpush1.xpose.msra.mxu0 0.0
  %229 = vmatprep.subr.mxu0 0.0
  %230 = vmatpush1.xpose.msra.mxu0 0.0
  %231 = vmatprep.subr.mxu0 0.0
  %232 = vmatpush1.xpose.msra.mxu0 0.0
  %233 = vmatprep.mubr.f32.mxu0 0.0
  %234 = vmatmul.mubr.f32.gmra.mrb[0].mxu0 %v122
  %v235 = vpop.f32.mrb[0].mxu0
  %v236 = vadd.f32 %v63, %v235
  %v237 = vpop.f32.mrb[0].mxu0
  %238 = vmatprep.mubr.f32.mxu0 0.0
  %239 = vmatmul.mubr.f32.gmra.mrb[0].mxu0 %v125
  %v240 = vpop.f32.mrb[0].mxu0
  %v241 = vadd.f32 %v68, %v240
  %v242 = vpop.f32.mrb[0].mxu0
  %243 = vmatprep.mubr.f32.mxu0 0.0
  %244 = vmatmul.mubr.f32.gmra.mrb[0].mxu0 %v128
  %v245 = vpop.f32.mrb[0].mxu0
  %v246 = vadd.f32 %v73, %v245
  %v247 = vpop.f32.mrb[0].mxu0
  %248 = vmatprep.mubr.f32.mxu0 0.0
  %249 = vmatmul.mubr.f32.gmra.mrb[0].mxu0 %v131
  %v250 = vpop.f32.mrb[0].mxu0
  %v251 = vadd.f32 %v78, %v250
  %v252 = vpop.f32.mrb[0].mxu0
  %253 = vmatprep.mubr.f32.mxu0 0.0
  %254 = vmatmul.mubr.f32.gmra.mrb[0].mxu0 %v134
  %v255 = vpop.f32.mrb[0].mxu0
  %v256 = vadd.f32 %v83, %v255
  %v257 = vpop.f32.mrb[0].mxu0
  %258 = vmatprep.mubr.f32.mxu0 0.0
  %259 = vmatmul.mubr.f32.gmra.mrb[0].mxu0 %v137
  %v260 = vpop.f32.mrb[0].mxu0
  %v261 = vadd.f32 %v88, %v260
  %v262 = vpop.f32.mrb[0].mxu0
  %263 = vmatprep.mubr.f32.mxu0 0.0
  %264 = vmatmul.mubr.f32.gmra.mrb[0].mxu0 %v140
  %v265 = vpop.f32.mrb[0].mxu0
  %v266 = vadd.f32 %v93, %v265
  %v267 = vpop.f32.mrb[0].mxu0
  %268 = vmatprep.mubr.f32.mxu0 0.0
  %269 = vmatmul.mubr.f32.gmra.mrb[0].mxu0 %v143
  %v270 = vpop.f32.mrb[0].mxu0
  %v271 = vadd.f32 %v98, %v270
  %v272 = vpop.f32.mrb[0].mxu0
  %273 = vmatprep.mubr.f32.mxu0 0.0
  %274 = vmatmul.mubr.f32.gmra.mrb[0].mxu0 %v146
  %v275 = vpop.f32.mrb[0].mxu0
  %v276 = vadd.f32 %v103, %v275
  %v277 = vpop.f32.mrb[0].mxu0
  %278 = vmatprep.mubr.f32.mxu0 0.0
  %279 = vmatmul.mubr.f32.gmra.mrb[0].mxu0 %v149
  %v280 = vpop.f32.mrb[0].mxu0
  %v281 = vadd.f32 %v108, %v280
  %v282 = vpop.f32.mrb[0].mxu0
  %283 = vmatprep.mubr.f32.mxu0 0.0
  %284 = vmatmul.mubr.f32.gmra.mrb[0].mxu0 %v152
  %v285 = vpop.f32.mrb[0].mxu0
  %v286 = vadd.f32 %v113, %v285
  %v287 = vpop.f32.mrb[0].mxu0
  %288 = vmatprep.mubr.f32.mxu0 0.0
  %289 = vmatmul.mubr.f32.gmra.mrb[0].mxu0 %v155
  %v290 = vpop.f32.mrb[0].mxu0
  %v291 = vadd.f32 %v118, %v290
  %v292 = vpop.f32.mrb[0].mxu0
  %293 = vdwg.mxu0
  %294 = vxpose.xlu0.b32.start [1/16] %v236, 128
  %295 = vxpose.xlu0.b32.cont [2/16] 0.0, 128
  %296 = vxpose.xlu0.b32.cont [3/16] 0.0, 128
  %297 = vxpose.xlu0.b32.cont [4/16] 0.0, 128
  %298 = vxpose.xlu0.b32.cont [5/16] 0.0, 128
  %299 = vxpose.xlu0.b32.cont [6/16] 0.0, 128
  %300 = vxpose.xlu0.b32.cont [7/16] 0.0, 128
  %301 = vxpose.xlu0.b32.cont [8/16] 0.0, 128
  %302 = vxpose.xlu0.b32.cont [9/16] 0.0, 128
  %303 = vxpose.xlu0.b32.cont [10/16] 0.0, 128
  %304 = vxpose.xlu0.b32.cont [11/16] 0.0, 128
  %305 = vxpose.xlu0.b32.cont [12/16] 0.0, 128
  %306 = vxpose.xlu0.b32.cont [13/16] 0.0, 128
  %307 = vxpose.xlu0.b32.cont [14/16] 0.0, 128
  %308 = vxpose.xlu0.b32.cont [15/16] 0.0, 128
  %309 = vxpose.xlu0.b32.end [16/16] 0.0, 128
  %v310 = vpop.trf.xlu0
  %v311 = vpop.trf.xlu0
  %v312 = vpop.trf.xlu0
  %v313 = vpop.trf.xlu0
  %v314 = vpop.trf.xlu0
  %v315 = vpop.trf.xlu0
  %v316 = vpop.trf.xlu0
  %v317 = vpop.trf.xlu0
  %v318 = vpop.trf.xlu0
  %v319 = vpop.trf.xlu0
  %v320 = vpop.trf.xlu0
  %v321 = vpop.trf.xlu0
  %v322 = vpop.trf.xlu0
  %v323 = vpop.trf.xlu0
  %v324 = vpop.trf.xlu0
  %v325 = vpop.trf.xlu0
  %326 = vxpose.xlu0.b32.start [1/16] %v241, 128
  %327 = vxpose.xlu0.b32.cont [2/16] 0.0, 128
  %328 = vxpose.xlu0.b32.cont [3/16] 0.0, 128
  %329 = vxpose.xlu0.b32.cont [4/16] 0.0, 128
  %330 = vxpose.xlu0.b32.cont [5/16] 0.0, 128
  %331 = vxpose.xlu0.b32.cont [6/16] 0.0, 128
  %332 = vxpose.xlu0.b32.cont [7/16] 0.0, 128
  %333 = vxpose.xlu0.b32.cont [8/16] 0.0, 128
  %334 = vxpose.xlu0.b32.cont [9/16] 0.0, 128
  %335 = vxpose.xlu0.b32.cont [10/16] 0.0, 128
  %336 = vxpose.xlu0.b32.cont [11/16] 0.0, 128
  %337 = vxpose.xlu0.b32.cont [12/16] 0.0, 128
  %338 = vxpose.xlu0.b32.cont [13/16] 0.0, 128
  %339 = vxpose.xlu0.b32.cont [14/16] 0.0, 128
  %340 = vxpose.xlu0.b32.cont [15/16] 0.0, 128
  %341 = vxpose.xlu0.b32.end [16/16] 0.0, 128
  %v342 = vpop.trf.xlu0
  %v343 = vpop.trf.xlu0
  %v344 = vpop.trf.xlu0
  %v345 = vpop.trf.xlu0
  %v346 = vpop.trf.xlu0
  %v347 = vpop.trf.xlu0
  %v348 = vpop.trf.xlu0
  %v349 = vpop.trf.xlu0
  %v350 = vpop.trf.xlu0
  %v351 = vpop.trf.xlu0
  %v352 = vpop.trf.xlu0
  %v353 = vpop.trf.xlu0
  %v354 = vpop.trf.xlu0
  %v355 = vpop.trf.xlu0
  %v356 = vpop.trf.xlu0
  %v357 = vpop.trf.xlu0
  %358 = vxpose.xlu0.b32.start [1/16] %v246, 128
  %359 = vxpose.xlu0.b32.cont [2/16] 0.0, 128
  %360 = vxpose.xlu0.b32.cont [3/16] 0.0, 128
  %361 = vxpose.xlu0.b32.cont [4/16] 0.0, 128
  %362 = vxpose.xlu0.b32.cont [5/16] 0.0, 128
  %363 = vxpose.xlu0.b32.cont [6/16] 0.0, 128
  %364 = vxpose.xlu0.b32.cont [7/16] 0.0, 128
  %365 = vxpose.xlu0.b32.cont [8/16] 0.0, 128
  %366 = vxpose.xlu0.b32.cont [9/16] 0.0, 128
  %367 = vxpose.xlu0.b32.cont [10/16] 0.0, 128
  %368 = vxpose.xlu0.b32.cont [11/16] 0.0, 128
  %369 = vxpose.xlu0.b32.cont [12/16] 0.0, 128
  %370 = vxpose.xlu0.b32.cont [13/16] 0.0, 128
  %371 = vxpose.xlu0.b32.cont [14/16] 0.0, 128
  %372 = vxpose.xlu0.b32.cont [15/16] 0.0, 128
  %373 = vxpose.xlu0.b32.end [16/16] 0.0, 128
  %v374 = vpop.trf.xlu0
  %v375 = vpop.trf.xlu0
  %v376 = vpop.trf.xlu0
  %v377 = vpop.trf.xlu0
  %v378 = vpop.trf.xlu0
  %v379 = vpop.trf.xlu0
  %v380 = vpop.trf.xlu0
  %v381 = vpop.trf.xlu0
  %v382 = vpop.trf.xlu0
  %v383 = vpop.trf.xlu0
  %v384 = vpop.trf.xlu0
  %v385 = vpop.trf.xlu0
  %v386 = vpop.trf.xlu0
  %v387 = vpop.trf.xlu0
  %v388 = vpop.trf.xlu0
  %v389 = vpop.trf.xlu0
  %390 = vxpose.xlu0.b32.start [1/16] %v251, 128
  %391 = vxpose.xlu0.b32.cont [2/16] 0.0, 128
  %392 = vxpose.xlu0.b32.cont [3/16] 0.0, 128
  %393 = vxpose.xlu0.b32.cont [4/16] 0.0, 128
  %394 = vxpose.xlu0.b32.cont [5/16] 0.0, 128
  %395 = vxpose.xlu0.b32.cont [6/16] 0.0, 128
  %396 = vxpose.xlu0.b32.cont [7/16] 0.0, 128
  %397 = vxpose.xlu0.b32.cont [8/16] 0.0, 128
  %398 = vxpose.xlu0.b32.cont [9/16] 0.0, 128
  %399 = vxpose.xlu0.b32.cont [10/16] 0.0, 128
  %400 = vxpose.xlu0.b32.cont [11/16] 0.0, 128
  %401 = vxpose.xlu0.b32.cont [12/16] 0.0, 128
  %402 = vxpose.xlu0.b32.cont [13/16] 0.0, 128
  %403 = vxpose.xlu0.b32.cont [14/16] 0.0, 128
  %404 = vxpose.xlu0.b32.cont [15/16] 0.0, 128
  %405 = vxpose.xlu0.b32.end [16/16] 0.0, 128
  %v406 = vpop.trf.xlu0
  %v407 = vpop.trf.xlu0
  %v408 = vpop.trf.xlu0
  %v409 = vpop.trf.xlu0
  %v410 = vpop.trf.xlu0
  %v411 = vpop.trf.xlu0
  %v412 = vpop.trf.xlu0
  %v413 = vpop.trf.xlu0
  %v414 = vpop.trf.xlu0
  %v415 = vpop.trf.xlu0
  %v416 = vpop.trf.xlu0
  %v417 = vpop.trf.xlu0
  %v418 = vpop.trf.xlu0
  %v419 = vpop.trf.xlu0
  %v420 = vpop.trf.xlu0
  %v421 = vpop.trf.xlu0
  %v422 = vlaneseq
  %v423 = vshrl.u32 %v422, 7
  %v424 = vadd.s32 %v423, 8
  %v425 = vadd.s32 %v423, 16
  %v426 = vadd.s32 %v423, 24
  %v427 = vlaneseq
  %v428 = vand.u32 %v427, 127
  %v429 = vand.u32 %v423, 3
  %v430 = vand.u32 %v424, 3
  %v431 = vand.u32 %v425, 3
  %v432 = vand.u32 %v426, 3
  %v433 = vand.u32 %v428, 3
  %v434 = vshra.s32 %v423, 2
  %v435 = vshra.s32 %v424, 2
  %v436 = vshra.s32 %v425, 2
  %v437 = vshra.s32 %v426, 2
  %v438 = vshra.s32 %v428, 2
  %vm439 = vcmp.eq.s32.totalorder %v429, %v433
  %vm440 = vcmp.eq.s32.totalorder %v430, %v433
  %vm441 = vcmp.eq.s32.totalorder %v431, %v433
  %vm442 = vcmp.eq.s32.totalorder %v432, %v433
  %v443 = vsel %vm439, 0.0, -1e+30
  %v444 = vsel %vm440, 0.0, -1e+30
  %v445 = vsel %vm441, 0.0, -1e+30
  %v446 = vsel %vm442, 0.0, -1e+30
  %vm447 = vcmp.eq.s32.totalorder %v434, %v438
  %vm448 = vcmp.eq.s32.totalorder %v435, %v438
  %vm449 = vcmp.eq.s32.totalorder %v436, %v438
  %vm450 = vcmp.eq.s32.totalorder %v437, %v438
  %v451 = vsel %vm447, 0.0078125, 0.0
  %v452 = vsel %vm448, 0.0078125, 0.0
  %v453 = vsel %vm449, 0.0078125, 0.0
  %v454 = vsel %vm450, 0.0078125, 0.0
  %vm455 = vcmask 64512
  %v457 = vsel %vm455, %v310, 0
  %v460 = vsel %vm455, %v311, 0
  %v463 = vsel %vm455, %v312, 0
  %v466 = vsel %vm455, %v313, 0
  %468 = vmatprep.subr.mxu0 0.0
  %469 = vmatpush1.msra.mxu0 %v256
  %470 = vmatprep.subr.mxu0 0.0
  %471 = vmatpush1.msra.mxu0 0.0
  %472 = vmatprep.subr.mxu0 0.0
  %473 = vmatpush1.msra.mxu0 0.0
  %474 = vmatprep.subr.mxu0 0.0
  %475 = vmatpush1.msra.mxu0 0.0
  %476 = vmatprep.subr.mxu0 0.0
  %477 = vmatpush1.msra.mxu0 0.0
  %478 = vmatprep.subr.mxu0 0.0
  %479 = vmatpush1.msra.mxu0 0.0
  %480 = vmatprep.subr.mxu0 0.0
  %481 = vmatpush1.msra.mxu0 0.0
  %482 = vmatprep.subr.mxu0 0.0
  %483 = vmatpush1.msra.mxu0 0.0
  %484 = vmatprep.subr.mxu0 0.0
  %485 = vmatpush1.msra.mxu0 0.0
  %486 = vmatprep.subr.mxu0 0.0
  %487 = vmatpush1.msra.mxu0 0.0
  %488 = vmatprep.subr.mxu0 0.0
  %489 = vmatpush1.msra.mxu0 0.0
  %490 = vmatprep.subr.mxu0 0.0
  %491 = vmatpush1.msra.mxu0 0.0
  %492 = vmatprep.subr.mxu0 0.0
  %493 = vmatpush1.msra.mxu0 0.0
  %494 = vmatprep.subr.mxu0 0.0
  %495 = vmatpush1.msra.mxu0 0.0
  %496 = vmatprep.subr.mxu0 0.0
  %497 = vmatpush1.msra.mxu0 0.0
  %498 = vmatprep.subr.mxu0 0.0
  %499 = vmatpush1.msra.mxu0 0.0
  %500 = vmatprep.subr.mxu0 0.0
  %501 = vmatpush1.msra.mxu0 0.0
  %502 = vmatprep.subr.mxu0 0.0
  %503 = vmatpush1.msra.mxu0 0.0
  %504 = vmatprep.subr.mxu0 0.0
  %505 = vmatpush1.msra.mxu0 0.0
  %506 = vmatprep.subr.mxu0 0.0
  %507 = vmatpush1.msra.mxu0 0.0
  %508 = vmatprep.subr.mxu0 0.0
  %509 = vmatpush1.msra.mxu0 0.0
  %510 = vmatprep.subr.mxu0 0.0
  %511 = vmatpush1.msra.mxu0 0.0
  %512 = vmatprep.subr.mxu0 0.0
  %513 = vmatpush1.msra.mxu0 0.0
  %514 = vmatprep.subr.mxu0 0.0
  %515 = vmatpush1.msra.mxu0 0.0
  %516 = vmatprep.subr.mxu0 0.0
  %517 = vmatpush1.msra.mxu0 0.0
  %518 = vmatprep.subr.mxu0 0.0
  %519 = vmatpush1.msra.mxu0 0.0
  %520 = vmatprep.subr.mxu0 0.0
  %521 = vmatpush1.msra.mxu0 0.0
  %522 = vmatprep.subr.mxu0 0.0
  %523 = vmatpush1.msra.mxu0 0.0
  %524 = vmatprep.subr.mxu0 0.0
  %525 = vmatpush1.msra.mxu0 0.0
  %526 = vmatprep.subr.mxu0 0.0
  %527 = vmatpush1.msra.mxu0 0.0
  %528 = vmatprep.subr.mxu0 0.0
  %529 = vmatpush1.msra.mxu0 0.0
  %530 = vmatprep.subr.mxu0 0.0
  %531 = vmatpush1.msra.mxu0 0.0
  %532 = vmatprep.mubr.f32.mxu0 0.0
  %533 = vmatmul.mubr.f32.gmra.mrb[0].mxu0 %v457
  %v534 = vpop.f32.mrb[0].mxu0
  %v535 = vadd.f32 %v443, %v534
  %v536 = vpop.f32.mrb[0].mxu0
  %537 = vmatprep.mubr.f32.mxu0 0.0
  %538 = vmatmul.mubr.f32.gmra.mrb[0].mxu0 %v460
  %v539 = vpop.f32.mrb[0].mxu0
  %v540 = vadd.f32 %v444, %v539
  %v541 = vpop.f32.mrb[0].mxu0
  %542 = vmatprep.mubr.f32.mxu0 0.0
  %543 = vmatmul.mubr.f32.gmra.mrb[0].mxu0 %v463
  %v544 = vpop.f32.mrb[0].mxu0
  %v545 = vadd.f32 %v445, %v544
  %v546 = vpop.f32.mrb[0].mxu0
  %547 = vmatprep.mubr.f32.mxu0 0.0
  %548 = vmatmul.mubr.f32.gmra.mrb[0].mxu0 %v466
  %v549 = vpop.f32.mrb[0].mxu0
  %v550 = vadd.f32 %v446, %v549
  %v551 = vpop.f32.mrb[0].mxu0
  %552 = vdwg.mxu0
  %v554 = vsel %vm455, %v342, 0
  %v557 = vsel %vm455, %v343, 0
  %v560 = vsel %vm455, %v344, 0
  %v563 = vsel %vm455, %v345, 0
  %565 = vmatprep.subr.mxu0 0.0
  %566 = vmatpush1.msra.mxu0 %v261
  %567 = vmatprep.subr.mxu0 0.0
  %568 = vmatpush1.msra.mxu0 0.0
  %569 = vmatprep.subr.mxu0 0.0
  %570 = vmatpush1.msra.mxu0 0.0
  %571 = vmatprep.subr.mxu0 0.0
  %572 = vmatpush1.msra.mxu0 0.0
  %573 = vmatprep.subr.mxu0 0.0
  %574 = vmatpush1.msra.mxu0 0.0
  %575 = vmatprep.subr.mxu0 0.0
  %576 = vmatpush1.msra.mxu0 0.0
  %577 = vmatprep.subr.mxu0 0.0
  %578 = vmatpush1.msra.mxu0 0.0
  %579 = vmatprep.subr.mxu0 0.0
  %580 = vmatpush1.msra.mxu0 0.0
  %581 = vmatprep.subr.mxu0 0.0
  %582 = vmatpush1.msra.mxu0 0.0
  %583 = vmatprep.subr.mxu0 0.0
  %584 = vmatpush1.msra.mxu0 0.0
  %585 = vmatprep.subr.mxu0 0.0
  %586 = vmatpush1.msra.mxu0 0.0
  %587 = vmatprep.subr.mxu0 0.0
  %588 = vmatpush1.msra.mxu0 0.0
  %589 = vmatprep.subr.mxu0 0.0
  %590 = vmatpush1.msra.mxu0 0.0
  %591 = vmatprep.subr.mxu0 0.0
  %592 = vmatpush1.msra.mxu0 0.0
  %593 = vmatprep.subr.mxu0 0.0
  %594 = vmatpush1.msra.mxu0 0.0
  %595 = vmatprep.subr.mxu0 0.0
  %596 = vmatpush1.msra.mxu0 0.0
  %597 = vmatprep.subr.mxu0 0.0
  %598 = vmatpush1.msra.mxu0 0.0
  %599 = vmatprep.subr.mxu0 0.0
  %600 = vmatpush1.msra.mxu0 0.0
  %601 = vmatprep.subr.mxu0 0.0
  %602 = vmatpush1.msra.mxu0 0.0
  %603 = vmatprep.subr.mxu0 0.0
  %604 = vmatpush1.msra.mxu0 0.0
  %605 = vmatprep.subr.mxu0 0.0
  %606 = vmatpush1.msra.mxu0 0.0
  %607 = vmatprep.subr.mxu0 0.0
  %608 = vmatpush1.msra.mxu0 0.0
  %609 = vmatprep.subr.mxu0 0.0
  %610 = vmatpush1.msra.mxu0 0.0
  %611 = vmatprep.subr.mxu0 0.0
  %612 = vmatpush1.msra.mxu0 0.0
  %613 = vmatprep.subr.mxu0 0.0
  %614 = vmatpush1.msra.mxu0 0.0
  %615 = vmatprep.subr.mxu0 0.0
  %616 = vmatpush1.msra.mxu0 0.0
  %617 = vmatprep.subr.mxu0 0.0
  %618 = vmatpush1.msra.mxu0 0.0
  %619 = vmatprep.subr.mxu0 0.0
  %620 = vmatpush1.msra.mxu0 0.0
  %621 = vmatprep.subr.mxu0 0.0
  %622 = vmatpush1.msra.mxu0 0.0
  %623 = vmatprep.subr.mxu0 0.0
  %624 = vmatpush1.msra.mxu0 0.0
  %625 = vmatprep.subr.mxu0 0.0
  %626 = vmatpush1.msra.mxu0 0.0
  %627 = vmatprep.subr.mxu0 0.0
  %628 = vmatpush1.msra.mxu0 0.0
  %629 = vmatprep.mubr.f32.mxu0 0.0
  %630 = vmatmul.mubr.f32.gmra.mrb[0].mxu0 %v554
  %v631 = vpop.f32.mrb[0].mxu0
  %v632 = vadd.f32 %v443, %v631
  %v633 = vpop.f32.mrb[0].mxu0
  %634 = vmatprep.mubr.f32.mxu0 0.0
  %635 = vmatmul.mubr.f32.gmra.mrb[0].mxu0 %v557
  %v636 = vpop.f32.mrb[0].mxu0
  %v637 = vadd.f32 %v444, %v636
  %v638 = vpop.f32.mrb[0].mxu0
  %639 = vmatprep.mubr.f32.mxu0 0.0
  %640 = vmatmul.mubr.f32.gmra.mrb[0].mxu0 %v560
  %v641 = vpop.f32.mrb[0].mxu0
  %v642 = vadd.f32 %v445, %v641
  %v643 = vpop.f32.mrb[0].mxu0
  %644 = vmatprep.mubr.f32.mxu0 0.0
  %645 = vmatmul.mubr.f32.gmra.mrb[0].mxu0 %v563
  %v646 = vpop.f32.mrb[0].mxu0
  %v647 = vadd.f32 %v446, %v646
  %v648 = vpop.f32.mrb[0].mxu0
  %649 = vdwg.mxu0
  %v651 = vsel %vm455, %v374, 0
  %v654 = vsel %vm455, %v375, 0
  %v657 = vsel %vm455, %v376, 0
  %v660 = vsel %vm455, %v377, 0
  %662 = vmatprep.subr.mxu0 0.0
  %663 = vmatpush1.msra.mxu0 %v266
  %664 = vmatprep.subr.mxu0 0.0
  %665 = vmatpush1.msra.mxu0 0.0
  %666 = vmatprep.subr.mxu0 0.0
  %667 = vmatpush1.msra.mxu0 0.0
  %668 = vmatprep.subr.mxu0 0.0
  %669 = vmatpush1.msra.mxu0 0.0
  %670 = vmatprep.subr.mxu0 0.0
  %671 = vmatpush1.msra.mxu0 0.0
  %672 = vmatprep.subr.mxu0 0.0
  %673 = vmatpush1.msra.mxu0 0.0
  %674 = vmatprep.subr.mxu0 0.0
  %675 = vmatpush1.msra.mxu0 0.0
  %676 = vmatprep.subr.mxu0 0.0
  %677 = vmatpush1.msra.mxu0 0.0
  %678 = vmatprep.subr.mxu0 0.0
  %679 = vmatpush1.msra.mxu0 0.0
  %680 = vmatprep.subr.mxu0 0.0
  %681 = vmatpush1.msra.mxu0 0.0
  %682 = vmatprep.subr.mxu0 0.0
  %683 = vmatpush1.msra.mxu0 0.0
  %684 = vmatprep.subr.mxu0 0.0
  %685 = vmatpush1.msra.mxu0 0.0
  %686 = vmatprep.subr.mxu0 0.0
  %687 = vmatpush1.msra.mxu0 0.0
  %688 = vmatprep.subr.mxu0 0.0
  %689 = vmatpush1.msra.mxu0 0.0
  %690 = vmatprep.subr.mxu0 0.0
  %691 = vmatpush1.msra.mxu0 0.0
  %692 = vmatprep.subr.mxu0 0.0
  %693 = vmatpush1.msra.mxu0 0.0
  %694 = vmatprep.subr.mxu0 0.0
  %695 = vmatpush1.msra.mxu0 0.0
  %696 = vmatprep.subr.mxu0 0.0
  %697 = vmatpush1.msra.mxu0 0.0
  %698 = vmatprep.subr.mxu0 0.0
  %699 = vmatpush1.msra.mxu0 0.0
  %700 = vmatprep.subr.mxu0 0.0
  %701 = vmatpush1.msra.mxu0 0.0
  %702 = vmatprep.subr.mxu0 0.0
  %703 = vmatpush1.msra.mxu0 0.0
  %704 = vmatprep.subr.mxu0 0.0
  %705 = vmatpush1.msra.mxu0 0.0
  %706 = vmatprep.subr.mxu0 0.0
  %707 = vmatpush1.msra.mxu0 0.0
  %708 = vmatprep.subr.mxu0 0.0
  %709 = vmatpush1.msra.mxu0 0.0
  %710 = vmatprep.subr.mxu0 0.0
  %711 = vmatpush1.msra.mxu0 0.0
  %712 = vmatprep.subr.mxu0 0.0
  %713 = vmatpush1.msra.mxu0 0.0
  %714 = vmatprep.subr.mxu0 0.0
  %715 = vmatpush1.msra.mxu0 0.0
  %716 = vmatprep.subr.mxu0 0.0
  %717 = vmatpush1.msra.mxu0 0.0
  %718 = vmatprep.subr.mxu0 0.0
  %719 = vmatpush1.msra.mxu0 0.0
  %720 = vmatprep.subr.mxu0 0.0
  %721 = vmatpush1.msra.mxu0 0.0
  %722 = vmatprep.subr.mxu0 0.0
  %723 = vmatpush1.msra.mxu0 0.0
  %724 = vmatprep.subr.mxu0 0.0
  %725 = vmatpush1.msra.mxu0 0.0
  %726 = vmatprep.mubr.f32.mxu0 0.0
  %727 = vmatmul.mubr.f32.gmra.mrb[0].mxu0 %v651
  %v728 = vpop.f32.mrb[0].mxu0
  %v729 = vadd.f32 %v443, %v728
  %v730 = vpop.f32.mrb[0].mxu0
  %731 = vmatprep.mubr.f32.mxu0 0.0
  %732 = vmatmul.mubr.f32.gmra.mrb[0].mxu0 %v654
  %v733 = vpop.f32.mrb[0].mxu0
  %v734 = vadd.f32 %v444, %v733
  %v735 = vpop.f32.mrb[0].mxu0
  %736 = vmatprep.mubr.f32.mxu0 0.0
  %737 = vmatmul.mubr.f32.gmra.mrb[0].mxu0 %v657
  %v738 = vpop.f32.mrb[0].mxu0
  %v739 = vadd.f32 %v445, %v738
  %v740 = vpop.f32.mrb[0].mxu0
  %741 = vmatprep.mubr.f32.mxu0 0.0
  %742 = vmatmul.mubr.f32.gmra.mrb[0].mxu0 %v660
  %v743 = vpop.f32.mrb[0].mxu0
  %v744 = vadd.f32 %v446, %v743
  %v745 = vpop.f32.mrb[0].mxu0
  %746 = vdwg.mxu0
  %v748 = vsel %vm455, %v406, 0
  %v751 = vsel %vm455, %v407, 0
  %v754 = vsel %vm455, %v408, 0
  %v757 = vsel %vm455, %v409, 0
  %759 = vmatprep.subr.mxu0 0.0
  %760 = vmatpush1.msra.mxu0 %v271
  %761 = vmatprep.subr.mxu0 0.0
  %762 = vmatpush1.msra.mxu0 0.0
  %763 = vmatprep.subr.mxu0 0.0
  %764 = vmatpush1.msra.mxu0 0.0
  %765 = vmatprep.subr.mxu0 0.0
  %766 = vmatpush1.msra.mxu0 0.0
  %767 = vmatprep.subr.mxu0 0.0
  %768 = vmatpush1.msra.mxu0 0.0
  %769 = vmatprep.subr.mxu0 0.0
  %770 = vmatpush1.msra.mxu0 0.0
  %771 = vmatprep.subr.mxu0 0.0
  %772 = vmatpush1.msra.mxu0 0.0
  %773 = vmatprep.subr.mxu0 0.0
  %774 = vmatpush1.msra.mxu0 0.0
  %775 = vmatprep.subr.mxu0 0.0
  %776 = vmatpush1.msra.mxu0 0.0
  %777 = vmatprep.subr.mxu0 0.0
  %778 = vmatpush1.msra.mxu0 0.0
  %779 = vmatprep.subr.mxu0 0.0
  %780 = vmatpush1.msra.mxu0 0.0
  %781 = vmatprep.subr.mxu0 0.0
  %782 = vmatpush1.msra.mxu0 0.0
  %783 = vmatprep.subr.mxu0 0.0
  %784 = vmatpush1.msra.mxu0 0.0
  %785 = vmatprep.subr.mxu0 0.0
  %786 = vmatpush1.msra.mxu0 0.0
  %787 = vmatprep.subr.mxu0 0.0
  %788 = vmatpush1.msra.mxu0 0.0
  %789 = vmatprep.subr.mxu0 0.0
  %790 = vmatpush1.msra.mxu0 0.0
  %791 = vmatprep.subr.mxu0 0.0
  %792 = vmatpush1.msra.mxu0 0.0
  %793 = vmatprep.subr.mxu0 0.0
  %794 = vmatpush1.msra.mxu0 0.0
  %795 = vmatprep.subr.mxu0 0.0
  %796 = vmatpush1.msra.mxu0 0.0
  %797 = vmatprep.subr.mxu0 0.0
  %798 = vmatpush1.msra.mxu0 0.0
  %799 = vmatprep.subr.mxu0 0.0
  %800 = vmatpush1.msra.mxu0 0.0
  %801 = vmatprep.subr.mxu0 0.0
  %802 = vmatpush1.msra.mxu0 0.0
  %803 = vmatprep.subr.mxu0 0.0
  %804 = vmatpush1.msra.mxu0 0.0
  %805 = vmatprep.subr.mxu0 0.0
  %806 = vmatpush1.msra.mxu0 0.0
  %807 = vmatprep.subr.mxu0 0.0
  %808 = vmatpush1.msra.mxu0 0.0
  %809 = vmatprep.subr.mxu0 0.0
  %810 = vmatpush1.msra.mxu0 0.0
  %811 = vmatprep.subr.mxu0 0.0
  %812 = vmatpush1.msra.mxu0 0.0
  %813 = vmatprep.subr.mxu0 0.0
  %814 = vmatpush1.msra.mxu0 0.0
  %815 = vmatprep.subr.mxu0 0.0
  %816 = vmatpush1.msra.mxu0 0.0
  %817 = vmatprep.subr.mxu0 0.0
  %818 = vmatpush1.msra.mxu0 0.0
  %819 = vmatprep.subr.mxu0 0.0
  %820 = vmatpush1.msra.mxu0 0.0
  %821 = vmatprep.subr.mxu0 0.0
  %822 = vmatpush1.msra.mxu0 0.0
  %823 = vmatprep.mubr.f32.mxu0 0.0
  %824 = vmatmul.mubr.f32.gmra.mrb[0].mxu0 %v748
  %v825 = vpop.f32.mrb[0].mxu0
  %v826 = vadd.f32 %v443, %v825
  %v827 = vpop.f32.mrb[0].mxu0
  %828 = vmatprep.mubr.f32.mxu0 0.0
  %829 = vmatmul.mubr.f32.gmra.mrb[0].mxu0 %v751
  %v830 = vpop.f32.mrb[0].mxu0
  %v831 = vadd.f32 %v444, %v830
  %v832 = vpop.f32.mrb[0].mxu0
  %833 = vmatprep.mubr.f32.mxu0 0.0
  %834 = vmatmul.mubr.f32.gmra.mrb[0].mxu0 %v754
  %v835 = vpop.f32.mrb[0].mxu0
  %v836 = vadd.f32 %v445, %v835
  %v837 = vpop.f32.mrb[0].mxu0
  %838 = vmatprep.mubr.f32.mxu0 0.0
  %839 = vmatmul.mubr.f32.gmra.mrb[0].mxu0 %v757
  %v840 = vpop.f32.mrb[0].mxu0
  %v841 = vadd.f32 %v446, %v840
  %v842 = vpop.f32.mrb[0].mxu0
  %843 = vdwg.mxu0
  %v844 = vsel %vm120, %v535, -inf
  %845 = vmax.xlane.f32.xlu0 %v844
  %v846 = vpop.xlane.xlu0 %845
  %v847 = vsel %vm120, %v540, -inf
  %848 = vmax.xlane.f32.xlu0 %v847
  %v849 = vpop.xlane.xlu0 %848
  %v850 = vsel %vm120, %v545, -inf
  %851 = vmax.xlane.f32.xlu0 %v850
  %v852 = vpop.xlane.xlu0 %851
  %v853 = vsel %vm120, %v550, -inf
  %854 = vmax.xlane.f32.xlu0 %v853
  %v855 = vpop.xlane.xlu0 %854
  %v856 = vsel %vm120, %v632, -inf
  %857 = vmax.xlane.f32.xlu0 %v856
  %v858 = vpop.xlane.xlu0 %857
  %v859 = vsel %vm120, %v637, -inf
  %860 = vmax.xlane.f32.xlu0 %v859
  %v861 = vpop.xlane.xlu0 %860
  %v862 = vsel %vm120, %v642, -inf
  %863 = vmax.xlane.f32.xlu0 %v862
  %v864 = vpop.xlane.xlu0 %863
  %v865 = vsel %vm120, %v647, -inf
  %866 = vmax.xlane.f32.xlu0 %v865
  %v867 = vpop.xlane.xlu0 %866
  %v868 = vsel %vm120, %v729, -inf
  %869 = vmax.xlane.f32.xlu0 %v868
  %v870 = vpop.xlane.xlu0 %869
  %v871 = vsel %vm120, %v734, -inf
  %872 = vmax.xlane.f32.xlu0 %v871
  %v873 = vpop.xlane.xlu0 %872
  %v874 = vsel %vm120, %v739, -inf
  %875 = vmax.xlane.f32.xlu0 %v874
  %v876 = vpop.xlane.xlu0 %875
  %v877 = vsel %vm120, %v744, -inf
  %878 = vmax.xlane.f32.xlu0 %v877
  %v879 = vpop.xlane.xlu0 %878
  %v880 = vsel %vm120, %v826, -inf
  %881 = vmax.xlane.f32.xlu0 %v880
  %v882 = vpop.xlane.xlu0 %881
  %v883 = vsel %vm120, %v831, -inf
  %884 = vmax.xlane.f32.xlu0 %v883
  %v885 = vpop.xlane.xlu0 %884
  %v886 = vsel %vm120, %v836, -inf
  %887 = vmax.xlane.f32.xlu0 %v886
  %v888 = vpop.xlane.xlu0 %887
  %v889 = vsel %vm120, %v841, -inf
  %890 = vmax.xlane.f32.xlu0 %v889
  %v891 = vpop.xlane.xlu0 %890
  %v892 = vsub.f32 %v535, %v846
  %v893 = vsub.f32 %v540, %v849
  %v894 = vsub.f32 %v545, %v852
  %v895 = vsub.f32 %v550, %v855
  %v896 = vsub.f32 %v632, %v858
  %v897 = vsub.f32 %v637, %v861
  %v898 = vsub.f32 %v642, %v864
  %v899 = vsub.f32 %v647, %v867
  %v900 = vsub.f32 %v729, %v870
  %v901 = vsub.f32 %v734, %v873
  %v902 = vsub.f32 %v739, %v876
  %v903 = vsub.f32 %v744, %v879
  %v904 = vsub.f32 %v826, %v882
  %v905 = vsub.f32 %v831, %v885
  %v906 = vsub.f32 %v836, %v888
  %v907 = vsub.f32 %v841, %v891
  %v908 = vmul.f32 %v892, 1.442695
  %v909 = vpow.pop %v908
  %v910 = vmul.f32 %v893, 1.442695
  %v911 = vpow.pop %v910
  %v912 = vmul.f32 %v894, 1.442695
  %v913 = vpow.pop %v912
  %v914 = vmul.f32 %v895, 1.442695
  %v915 = vpow.pop %v914
  %v916 = vmul.f32 %v896, 1.442695
  %v917 = vpow.pop %v916
  %v918 = vmul.f32 %v897, 1.442695
  %v919 = vpow.pop %v918
  %v920 = vmul.f32 %v898, 1.442695
  %v921 = vpow.pop %v920
  %v922 = vmul.f32 %v899, 1.442695
  %v923 = vpow.pop %v922
  %v924 = vmul.f32 %v900, 1.442695
  %v925 = vpow.pop %v924
  %v926 = vmul.f32 %v901, 1.442695
  %v927 = vpow.pop %v926
  %v928 = vmul.f32 %v902, 1.442695
  %v929 = vpow.pop %v928
  %v930 = vmul.f32 %v903, 1.442695
  %v931 = vpow.pop %v930
  %v932 = vmul.f32 %v904, 1.442695
  %v933 = vpow.pop %v932
  %v934 = vmul.f32 %v905, 1.442695
  %v935 = vpow.pop %v934
  %v936 = vmul.f32 %v906, 1.442695
  %v937 = vpow.pop %v936
  %v938 = vmul.f32 %v907, 1.442695
  %v939 = vpow.pop %v938
  %v940 = vsel %vm120, %v909, 0.0
  %941 = vadd.xlane.f32.xlu0 %v940
  %v942 = vpop.xlane.xlu0 %941
  %v943 = vsel %vm120, %v911, 0.0
  %944 = vadd.xlane.f32.xlu0 %v943
  %v945 = vpop.xlane.xlu0 %944
  %v946 = vsel %vm120, %v913, 0.0
  %947 = vadd.xlane.f32.xlu0 %v946
  %v948 = vpop.xlane.xlu0 %947
  %v949 = vsel %vm120, %v915, 0.0
  %950 = vadd.xlane.f32.xlu0 %v949
  %v951 = vpop.xlane.xlu0 %950
  %v952 = vsel %vm120, %v917, 0.0
  %953 = vadd.xlane.f32.xlu0 %v952
  %v954 = vpop.xlane.xlu0 %953
  %v955 = vsel %vm120, %v919, 0.0
  %956 = vadd.xlane.f32.xlu0 %v955
  %v957 = vpop.xlane.xlu0 %956
  %v958 = vsel %vm120, %v921, 0.0
  %959 = vadd.xlane.f32.xlu0 %v958
  %v960 = vpop.xlane.xlu0 %959
  %v961 = vsel %vm120, %v923, 0.0
  %962 = vadd.xlane.f32.xlu0 %v961
  %v963 = vpop.xlane.xlu0 %962
  %v964 = vsel %vm120, %v925, 0.0
  %965 = vadd.xlane.f32.xlu0 %v964
  %v966 = vpop.xlane.xlu0 %965
  %v967 = vsel %vm120, %v927, 0.0
  %968 = vadd.xlane.f32.xlu0 %v967
  %v969 = vpop.xlane.xlu0 %968
  %v970 = vsel %vm120, %v929, 0.0
  %971 = vadd.xlane.f32.xlu0 %v970
  %v972 = vpop.xlane.xlu0 %971
  %v973 = vsel %vm120, %v931, 0.0
  %974 = vadd.xlane.f32.xlu0 %v973
  %v975 = vpop.xlane.xlu0 %974
  %v976 = vsel %vm120, %v933, 0.0
  %977 = vadd.xlane.f32.xlu0 %v976
  %v978 = vpop.xlane.xlu0 %977
  %v979 = vsel %vm120, %v935, 0.0
  %980 = vadd.xlane.f32.xlu0 %v979
  %v981 = vpop.xlane.xlu0 %980
  %v982 = vsel %vm120, %v937, 0.0
  %983 = vadd.xlane.f32.xlu0 %v982
  %v984 = vpop.xlane.xlu0 %983
  %v985 = vsel %vm120, %v939, 0.0
  %986 = vadd.xlane.f32.xlu0 %v985
  %v987 = vpop.xlane.xlu0 %986
  %v988 = vrcp.pop %v942
  %v989 = vrcp.pop %v945
  %v990 = vrcp.pop %v948
  %v991 = vrcp.pop %v951
  %v992 = vrcp.pop %v954
  %v993 = vrcp.pop %v957
  %v994 = vrcp.pop %v960
  %v995 = vrcp.pop %v963
  %v996 = vrcp.pop %v966
  %v997 = vrcp.pop %v969
  %v998 = vrcp.pop %v972
  %v999 = vrcp.pop %v975
  %v1000 = vrcp.pop %v978
  %v1001 = vrcp.pop %v981
  %v1002 = vrcp.pop %v984
  %v1003 = vrcp.pop %v987
  %v1004 = vmul.f32 %v909, %v988
  %v1005 = vmul.f32 %v911, %v989
  %v1006 = vmul.f32 %v913, %v990
  %v1007 = vmul.f32 %v915, %v991
  %v1008 = vmul.f32 %v917, %v992
  %v1009 = vmul.f32 %v919, %v993
  %v1010 = vmul.f32 %v921, %v994
  %v1011 = vmul.f32 %v923, %v995
  %v1012 = vmul.f32 %v925, %v996
  %v1013 = vmul.f32 %v927, %v997
  %v1014 = vmul.f32 %v929, %v998
  %v1015 = vmul.f32 %v931, %v999
  %v1016 = vmul.f32 %v933, %v1000
  %v1017 = vmul.f32 %v935, %v1001
  %v1018 = vmul.f32 %v937, %v1002
  %v1019 = vmul.f32 %v939, %v1003
  %v1021 = vsel %vm120, %v276, 0
  %v1024 = vsel %vm120, %v1004, 0
  %v1027 = vsel %vm120, %v1005, 0
  %v1030 = vsel %vm120, %v1006, 0
  %v1033 = vsel %vm120, %v1007, 0
  %1035 = vmatprep.subr.mxu0 0.0
  %1036 = vmatpush1.xpose.msra.mxu0 %v1024
  %1037 = vmatprep.subr.mxu0 0.0
  %1038 = vmatpush1.xpose.msra.mxu0 %v1027
  %1039 = vmatprep.subr.mxu0 0.0
  %1040 = vmatpush1.xpose.msra.mxu0 %v1030
  %1041 = vmatprep.subr.mxu0 0.0
  %1042 = vmatpush1.xpose.msra.mxu0 %v1033
  %1043 = vmatprep.subr.mxu0 0.0
  %1044 = vmatpush1.xpose.msra.mxu0 0.0
  %1045 = vmatprep.subr.mxu0 0.0
  %1046 = vmatpush1.xpose.msra.mxu0 0.0
  %1047 = vmatprep.subr.mxu0 0.0
  %1048 = vmatpush1.xpose.msra.mxu0 0.0
  %1049 = vmatprep.subr.mxu0 0.0
  %1050 = vmatpush1.xpose.msra.mxu0 0.0
  %1051 = vmatprep.subr.mxu0 0.0
  %1052 = vmatpush1.xpose.msra.mxu0 0.0
  %1053 = vmatprep.subr.mxu0 0.0
  %1054 = vmatpush1.xpose.msra.mxu0 0.0
  %1055 = vmatprep.subr.mxu0 0.0
  %1056 = vmatpush1.xpose.msra.mxu0 0.0
  %1057 = vmatprep.subr.mxu0 0.0
  %1058 = vmatpush1.xpose.msra.mxu0 0.0
  %1059 = vmatprep.subr.mxu0 0.0
  %1060 = vmatpush1.xpose.msra.mxu0 0.0
  %1061 = vmatprep.subr.mxu0 0.0
  %1062 = vmatpush1.xpose.msra.mxu0 0.0
  %1063 = vmatprep.subr.mxu0 0.0
  %1064 = vmatpush1.xpose.msra.mxu0 0.0
  %1065 = vmatprep.subr.mxu0 0.0
  %1066 = vmatpush1.xpose.msra.mxu0 0.0
  %1067 = vmatprep.subr.mxu0 0.0
  %1068 = vmatpush1.xpose.msra.mxu0 0.0
  %1069 = vmatprep.subr.mxu0 0.0
  %1070 = vmatpush1.xpose.msra.mxu0 0.0
  %1071 = vmatprep.subr.mxu0 0.0
  %1072 = vmatpush1.xpose.msra.mxu0 0.0
  %1073 = vmatprep.subr.mxu0 0.0
  %1074 = vmatpush1.xpose.msra.mxu0 0.0
  %1075 = vmatprep.subr.mxu0 0.0
  %1076 = vmatpush1.xpose.msra.mxu0 0.0
  %1077 = vmatprep.subr.mxu0 0.0
  %1078 = vmatpush1.xpose.msra.mxu0 0.0
  %1079 = vmatprep.subr.mxu0 0.0
  %1080 = vmatpush1.xpose.msra.mxu0 0.0
  %1081 = vmatprep.subr.mxu0 0.0
  %1082 = vmatpush1.xpose.msra.mxu0 0.0
  %1083 = vmatprep.subr.mxu0 0.0
  %1084 = vmatpush1.xpose.msra.mxu0 0.0
  %1085 = vmatprep.subr.mxu0 0.0
  %1086 = vmatpush1.xpose.msra.mxu0 0.0
  %1087 = vmatprep.subr.mxu0 0.0
  %1088 = vmatpush1.xpose.msra.mxu0 0.0
  %1089 = vmatprep.subr.mxu0 0.0
  %1090 = vmatpush1.xpose.msra.mxu0 0.0
  %1091 = vmatprep.subr.mxu0 0.0
  %1092 = vmatpush1.xpose.msra.mxu0 0.0
  %1093 = vmatprep.subr.mxu0 0.0
  %1094 = vmatpush1.xpose.msra.mxu0 0.0
  %1095 = vmatprep.subr.mxu0 0.0
  %1096 = vmatpush1.xpose.msra.mxu0 0.0
  %1097 = vmatprep.subr.mxu0 0.0
  %1098 = vmatpush1.xpose.msra.mxu0 0.0
  %1099 = vmatprep.mubr.f32.mxu0 0.0
  %1100 = vmatmul.mubr.f32.gmra.mrb[0].mxu0 %v1021
  %v1101 = vpop.f32.mrb[0].mxu0
  %v1102 = vadd.f32 0.0, %v1101
  %v1103 = vpop.f32.mrb[0].mxu0
  %1104 = vdwg.mxu0
  %v1106 = vsel %vm120, %v281, 0
  %v1109 = vsel %vm120, %v1008, 0
  %v1112 = vsel %vm120, %v1009, 0
  %v1115 = vsel %vm120, %v1010, 0
  %v1118 = vsel %vm120, %v1011, 0
  %1120 = vmatprep.subr.mxu0 0.0
  %1121 = vmatpush1.xpose.msra.mxu0 %v1109
  %1122 = vmatprep.subr.mxu0 0.0
  %1123 = vmatpush1.xpose.msra.mxu0 %v1112
  %1124 = vmatprep.subr.mxu0 0.0
  %1125 = vmatpush1.xpose.msra.mxu0 %v1115
  %1126 = vmatprep.subr.mxu0 0.0
  %1127 = vmatpush1.xpose.msra.mxu0 %v1118
  %1128 = vmatprep.subr.mxu0 0.0
  %1129 = vmatpush1.xpose.msra.mxu0 0.0
  %1130 = vmatprep.subr.mxu0 0.0
  %1131 = vmatpush1.xpose.msra.mxu0 0.0
  %1132 = vmatprep.subr.mxu0 0.0
  %1133 = vmatpush1.xpose.msra.mxu0 0.0
  %1134 = vmatprep.subr.mxu0 0.0
  %1135 = vmatpush1.xpose.msra.mxu0 0.0
  %1136 = vmatprep.subr.mxu0 0.0
  %1137 = vmatpush1.xpose.msra.mxu0 0.0
  %1138 = vmatprep.subr.mxu0 0.0
  %1139 = vmatpush1.xpose.msra.mxu0 0.0
  %1140 = vmatprep.subr.mxu0 0.0
  %1141 = vmatpush1.xpose.msra.mxu0 0.0
  %1142 = vmatprep.subr.mxu0 0.0
  %1143 = vmatpush1.xpose.msra.mxu0 0.0
  %1144 = vmatprep.subr.mxu0 0.0
  %1145 = vmatpush1.xpose.msra.mxu0 0.0
  %1146 = vmatprep.subr.mxu0 0.0
  %1147 = vmatpush1.xpose.msra.mxu0 0.0
  %1148 = vmatprep.subr.mxu0 0.0
  %1149 = vmatpush1.xpose.msra.mxu0 0.0
  %1150 = vmatprep.subr.mxu0 0.0
  %1151 = vmatpush1.xpose.msra.mxu0 0.0
  %1152 = vmatprep.subr.mxu0 0.0
  %1153 = vmatpush1.xpose.msra.mxu0 0.0
  %1154 = vmatprep.subr.mxu0 0.0
  %1155 = vmatpush1.xpose.msra.mxu0 0.0
  %1156 = vmatprep.subr.mxu0 0.0
  %1157 = vmatpush1.xpose.msra.mxu0 0.0
  %1158 = vmatprep.subr.mxu0 0.0
  %1159 = vmatpush1.xpose.msra.mxu0 0.0
  %1160 = vmatprep.subr.mxu0 0.0
  %1161 = vmatpush1.xpose.msra.mxu0 0.0
  %1162 = vmatprep.subr.mxu0 0.0
  %1163 = vmatpush1.xpose.msra.mxu0 0.0
  %1164 = vmatprep.subr.mxu0 0.0
  %1165 = vmatpush1.xpose.msra.mxu0 0.0
  %1166 = vmatprep.subr.mxu0 0.0
  %1167 = vmatpush1.xpose.msra.mxu0 0.0
  %1168 = vmatprep.subr.mxu0 0.0
  %1169 = vmatpush1.xpose.msra.mxu0 0.0
  %1170 = vmatprep.subr.mxu0 0.0
  %1171 = vmatpush1.xpose.msra.mxu0 0.0
  %1172 = vmatprep.subr.mxu0 0.0
  %1173 = vmatpush1.xpose.msra.mxu0 0.0
  %1174 = vmatprep.subr.mxu0 0.0
  %1175 = vmatpush1.xpose.msra.mxu0 0.0
  %1176 = vmatprep.subr.mxu0 0.0
  %1177 = vmatpush1.xpose.msra.mxu0 0.0
  %1178 = vmatprep.subr.mxu0 0.0
  %1179 = vmatpush1.xpose.msra.mxu0 0.0
  %1180 = vmatprep.subr.mxu0 0.0
  %1181 = vmatpush1.xpose.msra.mxu0 0.0
  %1182 = vmatprep.subr.mxu0 0.0
  %1183 = vmatpush1.xpose.msra.mxu0 0.0
  %1184 = vmatprep.mubr.f32.mxu0 0.0
  %1185 = vmatmul.mubr.f32.gmra.mrb[0].mxu0 %v1106
  %v1186 = vpop.f32.mrb[0].mxu0
  %v1187 = vadd.f32 0.0, %v1186
  %v1188 = vpop.f32.mrb[0].mxu0
  %1189 = vdwg.mxu0
  %v1191 = vsel %vm120, %v286, 0
  %v1194 = vsel %vm120, %v1012, 0
  %v1197 = vsel %vm120, %v1013, 0
  %v1200 = vsel %vm120, %v1014, 0
  %v1203 = vsel %vm120, %v1015, 0
  %1205 = vmatprep.subr.mxu0 0.0
  %1206 = vmatpush1.xpose.msra.mxu0 %v1194
  %1207 = vmatprep.subr.mxu0 0.0
  %1208 = vmatpush1.xpose.msra.mxu0 %v1197
  %1209 = vmatprep.subr.mxu0 0.0
  %1210 = vmatpush1.xpose.msra.mxu0 %v1200
  %1211 = vmatprep.subr.mxu0 0.0
  %1212 = vmatpush1.xpose.msra.mxu0 %v1203
  %1213 = vmatprep.subr.mxu0 0.0
  %1214 = vmatpush1.xpose.msra.mxu0 0.0
  %1215 = vmatprep.subr.mxu0 0.0
  %1216 = vmatpush1.xpose.msra.mxu0 0.0
  %1217 = vmatprep.subr.mxu0 0.0
  %1218 = vmatpush1.xpose.msra.mxu0 0.0
  %1219 = vmatprep.subr.mxu0 0.0
  %1220 = vmatpush1.xpose.msra.mxu0 0.0
  %1221 = vmatprep.subr.mxu0 0.0
  %1222 = vmatpush1.xpose.msra.mxu0 0.0
  %1223 = vmatprep.subr.mxu0 0.0
  %1224 = vmatpush1.xpose.msra.mxu0 0.0
  %1225 = vmatprep.subr.mxu0 0.0
  %1226 = vmatpush1.xpose.msra.mxu0 0.0
  %1227 = vmatprep.subr.mxu0 0.0
  %1228 = vmatpush1.xpose.msra.mxu0 0.0
  %1229 = vmatprep.subr.mxu0 0.0
  %1230 = vmatpush1.xpose.msra.mxu0 0.0
  %1231 = vmatprep.subr.mxu0 0.0
  %1232 = vmatpush1.xpose.msra.mxu0 0.0
  %1233 = vmatprep.subr.mxu0 0.0
  %1234 = vmatpush1.xpose.msra.mxu0 0.0
  %1235 = vmatprep.subr.mxu0 0.0
  %1236 = vmatpush1.xpose.msra.mxu0 0.0
  %1237 = vmatprep.subr.mxu0 0.0
  %1238 = vmatpush1.xpose.msra.mxu0 0.0
  %1239 = vmatprep.subr.mxu0 0.0
  %1240 = vmatpush1.xpose.msra.mxu0 0.0
  %1241 = vmatprep.subr.mxu0 0.0
  %1242 = vmatpush1.xpose.msra.mxu0 0.0
  %1243 = vmatprep.subr.mxu0 0.0
  %1244 = vmatpush1.xpose.msra.mxu0 0.0
  %1245 = vmatprep.subr.mxu0 0.0
  %1246 = vmatpush1.xpose.msra.mxu0 0.0
  %1247 = vmatprep.subr.mxu0 0.0
  %1248 = vmatpush1.xpose.msra.mxu0 0.0
  %1249 = vmatprep.subr.mxu0 0.0
  %1250 = vmatpush1.xpose.msra.mxu0 0.0
  %1251 = vmatprep.subr.mxu0 0.0
  %1252 = vmatpush1.xpose.msra.mxu0 0.0
  %1253 = vmatprep.subr.mxu0 0.0
  %1254 = vmatpush1.xpose.msra.mxu0 0.0
  %1255 = vmatprep.subr.mxu0 0.0
  %1256 = vmatpush1.xpose.msra.mxu0 0.0
  %1257 = vmatprep.subr.mxu0 0.0
  %1258 = vmatpush1.xpose.msra.mxu0 0.0
  %1259 = vmatprep.subr.mxu0 0.0
  %1260 = vmatpush1.xpose.msra.mxu0 0.0
  %1261 = vmatprep.subr.mxu0 0.0
  %1262 = vmatpush1.xpose.msra.mxu0 0.0
  %1263 = vmatprep.subr.mxu0 0.0
  %1264 = vmatpush1.xpose.msra.mxu0 0.0
  %1265 = vmatprep.subr.mxu0 0.0
  %1266 = vmatpush1.xpose.msra.mxu0 0.0
  %1267 = vmatprep.subr.mxu0 0.0
  %1268 = vmatpush1.xpose.msra.mxu0 0.0
  %1269 = vmatprep.mubr.f32.mxu0 0.0
  %1270 = vmatmul.mubr.f32.gmra.mrb[0].mxu0 %v1191
  %v1271 = vpop.f32.mrb[0].mxu0
  %v1272 = vadd.f32 0.0, %v1271
  %v1273 = vpop.f32.mrb[0].mxu0
  %1274 = vdwg.mxu0
  %v1276 = vsel %vm120, %v291, 0
  %v1279 = vsel %vm120, %v1016, 0
  %v1282 = vsel %vm120, %v1017, 0
  %v1285 = vsel %vm120, %v1018, 0
  %v1288 = vsel %vm120, %v1019, 0
  %1290 = vmatprep.subr.mxu0 0.0
  %1291 = vmatpush1.xpose.msra.mxu0 %v1279
  %1292 = vmatprep.subr.mxu0 0.0
  %1293 = vmatpush1.xpose.msra.mxu0 %v1282
  %1294 = vmatprep.subr.mxu0 0.0
  %1295 = vmatpush1.xpose.msra.mxu0 %v1285
  %1296 = vmatprep.subr.mxu0 0.0
  %1297 = vmatpush1.xpose.msra.mxu0 %v1288
  %1298 = vmatprep.subr.mxu0 0.0
  %1299 = vmatpush1.xpose.msra.mxu0 0.0
  %1300 = vmatprep.subr.mxu0 0.0
  %1301 = vmatpush1.xpose.msra.mxu0 0.0
  %1302 = vmatprep.subr.mxu0 0.0
  %1303 = vmatpush1.xpose.msra.mxu0 0.0
  %1304 = vmatprep.subr.mxu0 0.0
  %1305 = vmatpush1.xpose.msra.mxu0 0.0
  %1306 = vmatprep.subr.mxu0 0.0
  %1307 = vmatpush1.xpose.msra.mxu0 0.0
  %1308 = vmatprep.subr.mxu0 0.0
  %1309 = vmatpush1.xpose.msra.mxu0 0.0
  %1310 = vmatprep.subr.mxu0 0.0
  %1311 = vmatpush1.xpose.msra.mxu0 0.0
  %1312 = vmatprep.subr.mxu0 0.0
  %1313 = vmatpush1.xpose.msra.mxu0 0.0
  %1314 = vmatprep.subr.mxu0 0.0
  %1315 = vmatpush1.xpose.msra.mxu0 0.0
  %1316 = vmatprep.subr.mxu0 0.0
  %1317 = vmatpush1.xpose.msra.mxu0 0.0
  %1318 = vmatprep.subr.mxu0 0.0
  %1319 = vmatpush1.xpose.msra.mxu0 0.0
  %1320 = vmatprep.subr.mxu0 0.0
  %1321 = vmatpush1.xpose.msra.mxu0 0.0
  %1322 = vmatprep.subr.mxu0 0.0
  %1323 = vmatpush1.xpose.msra.mxu0 0.0
  %1324 = vmatprep.subr.mxu0 0.0
  %1325 = vmatpush1.xpose.msra.mxu0 0.0
  %1326 = vmatprep.subr.mxu0 0.0
  %1327 = vmatpush1.xpose.msra.mxu0 0.0
  %1328 = vmatprep.subr.mxu0 0.0
  %1329 = vmatpush1.xpose.msra.mxu0 0.0
  %1330 = vmatprep.subr.mxu0 0.0
  %1331 = vmatpush1.xpose.msra.mxu0 0.0
  %1332 = vmatprep.subr.mxu0 0.0
  %1333 = vmatpush1.xpose.msra.mxu0 0.0
  %1334 = vmatprep.subr.mxu0 0.0
  %1335 = vmatpush1.xpose.msra.mxu0 0.0
  %1336 = vmatprep.subr.mxu0 0.0
  %1337 = vmatpush1.xpose.msra.mxu0 0.0
  %1338 = vmatprep.subr.mxu0 0.0
  %1339 = vmatpush1.xpose.msra.mxu0 0.0
  %1340 = vmatprep.subr.mxu0 0.0
  %1341 = vmatpush1.xpose.msra.mxu0 0.0
  %1342 = vmatprep.subr.mxu0 0.0
  %1343 = vmatpush1.xpose.msra.mxu0 0.0
  %1344 = vmatprep.subr.mxu0 0.0
  %1345 = vmatpush1.xpose.msra.mxu0 0.0
  %1346 = vmatprep.subr.mxu0 0.0
  %1347 = vmatpush1.xpose.msra.mxu0 0.0
  %1348 = vmatprep.subr.mxu0 0.0
  %1349 = vmatpush1.xpose.msra.mxu0 0.0
  %1350 = vmatprep.subr.mxu0 0.0
  %1351 = vmatpush1.xpose.msra.mxu0 0.0
  %1352 = vmatprep.subr.mxu0 0.0
  %1353 = vmatpush1.xpose.msra.mxu0 0.0
  %1354 = vmatprep.mubr.f32.mxu0 0.0
  %1355 = vmatmul.mubr.f32.gmra.mrb[0].mxu0 %v1276
  %v1356 = vpop.f32.mrb[0].mxu0
  %v1357 = vadd.f32 0.0, %v1356
  %v1358 = vpop.f32.mrb[0].mxu0
  %1359 = vdwg.mxu0
  %v1360 = vld [vmem:[%s2] sm:$0xff]
  %v1361 = vld [vmem:[%s2 + $0x8] sm:$0xff]
  %v1362 = vld [vmem:[%s2 + $0x10] sm:$0xff]
  %v1363 = vld [vmem:[%s2 + $0x18] sm:$0xff]
  %1365 = vset.pattern.permute.xlu0 0
  %1366 = vperm.xlu0 %1365, %v36
  %v1367 = vpop.permute.xlu0 %1366
  %1370 = vset.pattern.permute.xlu0 0
  %1371 = vperm.xlu0 %1370, %v37
  %v1372 = vpop.permute.xlu0 %1371
  %1375 = vset.pattern.permute.xlu0 0
  %1376 = vperm.xlu0 %1375, %v38
  %v1377 = vpop.permute.xlu0 %1376
  %1380 = vset.pattern.permute.xlu0 0
  %1381 = vperm.xlu0 %1380, %v39
  %v1382 = vpop.permute.xlu0 %1381
  %v1385 = vsel %vm120, %v1360, 0
  %v1388 = vsel %vm120, %v1361, 0
  %v1391 = vsel %vm120, %v1362, 0
  %v1394 = vsel %vm120, %v1363, 0
  %1396 = vmatprep.subr.mxu0 0.0
  %1397 = vmatpush1.msra.mxu0 %v1102
  %1398 = vmatprep.subr.mxu0 0.0
  %1399 = vmatpush1.msra.mxu0 %v1187
  %1400 = vmatprep.subr.mxu0 0.0
  %1401 = vmatpush1.msra.mxu0 %v1272
  %1402 = vmatprep.subr.mxu0 0.0
  %1403 = vmatpush1.msra.mxu0 %v1357
  %1404 = vmatprep.subr.mxu0 0.0
  %1405 = vmatpush1.msra.mxu0 0.0
  %1406 = vmatprep.subr.mxu0 0.0
  %1407 = vmatpush1.msra.mxu0 0.0
  %1408 = vmatprep.subr.mxu0 0.0
  %1409 = vmatpush1.msra.mxu0 0.0
  %1410 = vmatprep.subr.mxu0 0.0
  %1411 = vmatpush1.msra.mxu0 0.0
  %1412 = vmatprep.subr.mxu0 0.0
  %1413 = vmatpush1.msra.mxu0 0.0
  %1414 = vmatprep.subr.mxu0 0.0
  %1415 = vmatpush1.msra.mxu0 0.0
  %1416 = vmatprep.subr.mxu0 0.0
  %1417 = vmatpush1.msra.mxu0 0.0
  %1418 = vmatprep.subr.mxu0 0.0
  %1419 = vmatpush1.msra.mxu0 0.0
  %1420 = vmatprep.subr.mxu0 0.0
  %1421 = vmatpush1.msra.mxu0 0.0
  %1422 = vmatprep.subr.mxu0 0.0
  %1423 = vmatpush1.msra.mxu0 0.0
  %1424 = vmatprep.subr.mxu0 0.0
  %1425 = vmatpush1.msra.mxu0 0.0
  %1426 = vmatprep.subr.mxu0 0.0
  %1427 = vmatpush1.msra.mxu0 0.0
  %1428 = vmatprep.subr.mxu0 0.0
  %1429 = vmatpush1.msra.mxu0 0.0
  %1430 = vmatprep.subr.mxu0 0.0
  %1431 = vmatpush1.msra.mxu0 0.0
  %1432 = vmatprep.subr.mxu0 0.0
  %1433 = vmatpush1.msra.mxu0 0.0
  %1434 = vmatprep.subr.mxu0 0.0
  %1435 = vmatpush1.msra.mxu0 0.0
  %1436 = vmatprep.subr.mxu0 0.0
  %1437 = vmatpush1.msra.mxu0 0.0
  %1438 = vmatprep.subr.mxu0 0.0
  %1439 = vmatpush1.msra.mxu0 0.0
  %1440 = vmatprep.subr.mxu0 0.0
  %1441 = vmatpush1.msra.mxu0 0.0
  %1442 = vmatprep.subr.mxu0 0.0
  %1443 = vmatpush1.msra.mxu0 0.0
  %1444 = vmatprep.subr.mxu0 0.0
  %1445 = vmatpush1.msra.mxu0 0.0
  %1446 = vmatprep.subr.mxu0 0.0
  %1447 = vmatpush1.msra.mxu0 0.0
  %1448 = vmatprep.subr.mxu0 0.0
  %1449 = vmatpush1.msra.mxu0 0.0
  %1450 = vmatprep.subr.mxu0 0.0
  %1451 = vmatpush1.msra.mxu0 0.0
  %1452 = vmatprep.subr.mxu0 0.0
  %1453 = vmatpush1.msra.mxu0 0.0
  %1454 = vmatprep.subr.mxu0 0.0
  %1455 = vmatpush1.msra.mxu0 0.0
  %1456 = vmatprep.subr.mxu0 0.0
  %1457 = vmatpush1.msra.mxu0 0.0
  %1458 = vmatprep.subr.mxu0 0.0
  %1459 = vmatpush1.msra.mxu0 0.0
  %1460 = vmatprep.mubr.f32.mxu0 0.0
  %1461 = vmatmul.mubr.f32.gmra.mrb[0].mxu0 %v1385
  %v1462 = vpop.f32.mrb[0].mxu0
  %v1463 = vadd.f32 %v1367, %v1462
  %v1464 = vpop.f32.mrb[0].mxu0
  %1465 = vmatprep.mubr.f32.mxu0 0.0
  %1466 = vmatmul.mubr.f32.gmra.mrb[0].mxu0 %v1388
  %v1467 = vpop.f32.mrb[0].mxu0
  %v1468 = vadd.f32 %v1372, %v1467
  %v1469 = vpop.f32.mrb[0].mxu0
  %1470 = vmatprep.mubr.f32.mxu0 0.0
  %1471 = vmatmul.mubr.f32.gmra.mrb[0].mxu0 %v1391
  %v1472 = vpop.f32.mrb[0].mxu0
  %v1473 = vadd.f32 %v1377, %v1472
  %v1474 = vpop.f32.mrb[0].mxu0
  %1475 = vmatprep.mubr.f32.mxu0 0.0
  %1476 = vmatmul.mubr.f32.gmra.mrb[0].mxu0 %v1394
  %v1477 = vpop.f32.mrb[0].mxu0
  %v1478 = vadd.f32 %v1382, %v1477
  %v1479 = vpop.f32.mrb[0].mxu0
  %1480 = vdwg.mxu0
  %v1482 = vsel %vm120, %v1463, 0
  %v1485 = vsel %vm120, %v1468, 0
  %v1488 = vsel %vm120, %v1473, 0
  %v1491 = vsel %vm120, %v1478, 0
  %1493 = vmatprep.subr.mxu0 0.0
  %1494 = vmatpush1.msra.mxu0 %v451
  %1495 = vmatprep.subr.mxu0 0.0
  %1496 = vmatpush1.msra.mxu0 %v452
  %1497 = vmatprep.subr.mxu0 0.0
  %1498 = vmatpush1.msra.mxu0 %v453
  %1499 = vmatprep.subr.mxu0 0.0
  %1500 = vmatpush1.msra.mxu0 %v454
  %1501 = vmatprep.subr.mxu0 0.0
  %1502 = vmatpush1.msra.mxu0 0.0
  %1503 = vmatprep.subr.mxu0 0.0
  %1504 = vmatpush1.msra.mxu0 0.0
  %1505 = vmatprep.subr.mxu0 0.0
  %1506 = vmatpush1.msra.mxu0 0.0
  %1507 = vmatprep.subr.mxu0 0.0
  %1508 = vmatpush1.msra.mxu0 0.0
  %1509 = vmatprep.subr.mxu0 0.0
  %1510 = vmatpush1.msra.mxu0 0.0
  %1511 = vmatprep.subr.mxu0 0.0
  %1512 = vmatpush1.msra.mxu0 0.0
  %1513 = vmatprep.subr.mxu0 0.0
  %1514 = vmatpush1.msra.mxu0 0.0
  %1515 = vmatprep.subr.mxu0 0.0
  %1516 = vmatpush1.msra.mxu0 0.0
  %1517 = vmatprep.subr.mxu0 0.0
  %1518 = vmatpush1.msra.mxu0 0.0
  %1519 = vmatprep.subr.mxu0 0.0
  %1520 = vmatpush1.msra.mxu0 0.0
  %1521 = vmatprep.subr.mxu0 0.0
  %1522 = vmatpush1.msra.mxu0 0.0
  %1523 = vmatprep.subr.mxu0 0.0
  %1524 = vmatpush1.msra.mxu0 0.0
  %1525 = vmatprep.subr.mxu0 0.0
  %1526 = vmatpush1.msra.mxu0 0.0
  %1527 = vmatprep.subr.mxu0 0.0
  %1528 = vmatpush1.msra.mxu0 0.0
  %1529 = vmatprep.subr.mxu0 0.0
  %1530 = vmatpush1.msra.mxu0 0.0
  %1531 = vmatprep.subr.mxu0 0.0
  %1532 = vmatpush1.msra.mxu0 0.0
  %1533 = vmatprep.subr.mxu0 0.0
  %1534 = vmatpush1.msra.mxu0 0.0
  %1535 = vmatprep.subr.mxu0 0.0
  %1536 = vmatpush1.msra.mxu0 0.0
  %1537 = vmatprep.subr.mxu0 0.0
  %1538 = vmatpush1.msra.mxu0 0.0
  %1539 = vmatprep.subr.mxu0 0.0
  %1540 = vmatpush1.msra.mxu0 0.0
  %1541 = vmatprep.subr.mxu0 0.0
  %1542 = vmatpush1.msra.mxu0 0.0
  %1543 = vmatprep.subr.mxu0 0.0
  %1544 = vmatpush1.msra.mxu0 0.0
  %1545 = vmatprep.subr.mxu0 0.0
  %1546 = vmatpush1.msra.mxu0 0.0
  %1547 = vmatprep.subr.mxu0 0.0
  %1548 = vmatpush1.msra.mxu0 0.0
  %1549 = vmatprep.subr.mxu0 0.0
  %1550 = vmatpush1.msra.mxu0 0.0
  %1551 = vmatprep.subr.mxu0 0.0
  %1552 = vmatpush1.msra.mxu0 0.0
  %1553 = vmatprep.subr.mxu0 0.0
  %1554 = vmatpush1.msra.mxu0 0.0
  %1555 = vmatprep.subr.mxu0 0.0
  %1556 = vmatpush1.msra.mxu0 0.0
  %1557 = vmatprep.mubr.f32.mxu0 0.0
  %1558 = vmatmul.mubr.f32.gmra.mrb[0].mxu0 %v1482
  %v1559 = vpop.f32.mrb[0].mxu0
  %v1560 = vadd.f32 0.0, %v1559
  %v1561 = vpop.f32.mrb[0].mxu0
  %1562 = vmatprep.mubr.f32.mxu0 0.0
  %1563 = vmatmul.mubr.f32.gmra.mrb[0].mxu0 %v1485
  %v1564 = vpop.f32.mrb[0].mxu0
  %v1565 = vadd.f32 0.0, %v1564
  %v1566 = vpop.f32.mrb[0].mxu0
  %1567 = vmatprep.mubr.f32.mxu0 0.0
  %1568 = vmatmul.mubr.f32.gmra.mrb[0].mxu0 %v1488
  %v1569 = vpop.f32.mrb[0].mxu0
  %v1570 = vadd.f32 0.0, %v1569
  %v1571 = vpop.f32.mrb[0].mxu0
  %1572 = vmatprep.mubr.f32.mxu0 0.0
  %1573 = vmatmul.mubr.f32.gmra.mrb[0].mxu0 %v1491
  %v1574 = vpop.f32.mrb[0].mxu0
  %v1575 = vadd.f32 0.0, %v1574
  %v1576 = vpop.f32.mrb[0].mxu0
  %1577 = vdwg.mxu0
  %v1578 = vsel %vm120, %v1560, 0.0
  %v1579 = vsel %vm120, %v1565, 0.0
  %v1580 = vadd.f32 %v1578, %v1579
  %v1581 = vsel %vm120, %v1570, 0.0
  %v1582 = vadd.f32 %v1580, %v1581
  %v1583 = vsel %vm120, %v1575, 0.0
  %v1584 = vadd.f32 %v1582, %v1583
  %v1585 = vrot.slane %v1584, 4
  %v1586 = vadd.f32 %v1584, %v1585
  %v1587 = vrot.slane %v1586, 2
  %v1588 = vadd.f32 %v1586, %v1587
  %v1589 = vrot.slane %v1588, 1
  %v1590 = vadd.f32 %v1588, %v1589
  %v1591 = vsub.f32 %v1463, %v1590
  %v1592 = vsub.f32 %v1468, %v1590
  %v1593 = vsub.f32 %v1473, %v1590
  %v1594 = vsub.f32 %v1478, %v1590
  %v1595 = vmul.f32 %v1591, %v1591
  %v1596 = vmul.f32 %v1592, %v1592
  %v1597 = vmul.f32 %v1593, %v1593
  %v1598 = vmul.f32 %v1594, %v1594
  %v1600 = vsel %vm120, %v1595, 0
  %v1603 = vsel %vm120, %v1596, 0
  %v1606 = vsel %vm120, %v1597, 0
  %v1609 = vsel %vm120, %v1598, 0
  %1611 = vmatprep.subr.mxu0 0.0
  %1612 = vmatpush1.msra.mxu0 %v451
  %1613 = vmatprep.subr.mxu0 0.0
  %1614 = vmatpush1.msra.mxu0 %v452
  %1615 = vmatprep.subr.mxu0 0.0
  %1616 = vmatpush1.msra.mxu0 %v453
  %1617 = vmatprep.subr.mxu0 0.0
  %1618 = vmatpush1.msra.mxu0 %v454
  %1619 = vmatprep.subr.mxu0 0.0
  %1620 = vmatpush1.msra.mxu0 0.0
  %1621 = vmatprep.subr.mxu0 0.0
  %1622 = vmatpush1.msra.mxu0 0.0
  %1623 = vmatprep.subr.mxu0 0.0
  %1624 = vmatpush1.msra.mxu0 0.0
  %1625 = vmatprep.subr.mxu0 0.0
  %1626 = vmatpush1.msra.mxu0 0.0
  %1627 = vmatprep.subr.mxu0 0.0
  %1628 = vmatpush1.msra.mxu0 0.0
  %1629 = vmatprep.subr.mxu0 0.0
  %1630 = vmatpush1.msra.mxu0 0.0
  %1631 = vmatprep.subr.mxu0 0.0
  %1632 = vmatpush1.msra.mxu0 0.0
  %1633 = vmatprep.subr.mxu0 0.0
  %1634 = vmatpush1.msra.mxu0 0.0
  %1635 = vmatprep.subr.mxu0 0.0
  %1636 = vmatpush1.msra.mxu0 0.0
  %1637 = vmatprep.subr.mxu0 0.0
  %1638 = vmatpush1.msra.mxu0 0.0
  %1639 = vmatprep.subr.mxu0 0.0
  %1640 = vmatpush1.msra.mxu0 0.0
  %1641 = vmatprep.subr.mxu0 0.0
  %1642 = vmatpush1.msra.mxu0 0.0
  %1643 = vmatprep.subr.mxu0 0.0
  %1644 = vmatpush1.msra.mxu0 0.0
  %1645 = vmatprep.subr.mxu0 0.0
  %1646 = vmatpush1.msra.mxu0 0.0
  %1647 = vmatprep.subr.mxu0 0.0
  %1648 = vmatpush1.msra.mxu0 0.0
  %1649 = vmatprep.subr.mxu0 0.0
  %1650 = vmatpush1.msra.mxu0 0.0
  %1651 = vmatprep.subr.mxu0 0.0
  %1652 = vmatpush1.msra.mxu0 0.0
  %1653 = vmatprep.subr.mxu0 0.0
  %1654 = vmatpush1.msra.mxu0 0.0
  %1655 = vmatprep.subr.mxu0 0.0
  %1656 = vmatpush1.msra.mxu0 0.0
  %1657 = vmatprep.subr.mxu0 0.0
  %1658 = vmatpush1.msra.mxu0 0.0
  %1659 = vmatprep.subr.mxu0 0.0
  %1660 = vmatpush1.msra.mxu0 0.0
  %1661 = vmatprep.subr.mxu0 0.0
  %1662 = vmatpush1.msra.mxu0 0.0
  %1663 = vmatprep.subr.mxu0 0.0
  %1664 = vmatpush1.msra.mxu0 0.0
  %1665 = vmatprep.subr.mxu0 0.0
  %1666 = vmatpush1.msra.mxu0 0.0
  %1667 = vmatprep.subr.mxu0 0.0
  %1668 = vmatpush1.msra.mxu0 0.0
  %1669 = vmatprep.subr.mxu0 0.0
  %1670 = vmatpush1.msra.mxu0 0.0
  %1671 = vmatprep.subr.mxu0 0.0
  %1672 = vmatpush1.msra.mxu0 0.0
  %1673 = vmatprep.subr.mxu0 0.0
  %1674 = vmatpush1.msra.mxu0 0.0
  %1675 = vmatprep.mubr.f32.mxu0 0.0
  %1676 = vmatmul.mubr.f32.gmra.mrb[0].mxu0 %v1600
  %v1677 = vpop.f32.mrb[0].mxu0
  %v1678 = vadd.f32 0.0, %v1677
  %v1679 = vpop.f32.mrb[0].mxu0
  %1680 = vmatprep.mubr.f32.mxu0 0.0
  %1681 = vmatmul.mubr.f32.gmra.mrb[0].mxu0 %v1603
  %v1682 = vpop.f32.mrb[0].mxu0
  %v1683 = vadd.f32 0.0, %v1682
  %v1684 = vpop.f32.mrb[0].mxu0
  %1685 = vmatprep.mubr.f32.mxu0 0.0
  %1686 = vmatmul.mubr.f32.gmra.mrb[0].mxu0 %v1606
  %v1687 = vpop.f32.mrb[0].mxu0
  %v1688 = vadd.f32 0.0, %v1687
  %v1689 = vpop.f32.mrb[0].mxu0
  %1690 = vmatprep.mubr.f32.mxu0 0.0
  %1691 = vmatmul.mubr.f32.gmra.mrb[0].mxu0 %v1609
  %v1692 = vpop.f32.mrb[0].mxu0
  %v1693 = vadd.f32 0.0, %v1692
  %v1694 = vpop.f32.mrb[0].mxu0
  %1695 = vdwg.mxu0
  %v1696 = vsel %vm120, %v1678, 0.0
  %v1697 = vsel %vm120, %v1683, 0.0
  %v1698 = vadd.f32 %v1696, %v1697
  %v1699 = vsel %vm120, %v1688, 0.0
  %v1700 = vadd.f32 %v1698, %v1699
  %v1701 = vsel %vm120, %v1693, 0.0
  %v1702 = vadd.f32 %v1700, %v1701
  %v1703 = vrot.slane %v1702, 4
  %v1704 = vadd.f32 %v1702, %v1703
  %v1705 = vrot.slane %v1704, 2
  %v1706 = vadd.f32 %v1704, %v1705
  %v1707 = vrot.slane %v1706, 1
  %v1708 = vadd.f32 %v1706, %v1707
  %v1709 = vadd.f32 %v1708, 1e-05
  %v1710 = vrsqrt.pop %v1709
  %v1711 = vmul.f32 %v1591, %v1710
  %v1712 = vmul.f32 %v1592, %v1710
  %v1713 = vmul.f32 %v1593, %v1710
  %v1714 = vmul.f32 %v1594, %v1710
  %v1715 = vmul.f32 %v1711, %v40
  %v1716 = vmul.f32 %v1712, %v41
  %v1717 = vmul.f32 %v1713, %v42
  %v1718 = vmul.f32 %v1714, %v43
  %v1719 = vadd.f32 %v1715, %v44
  %v1720 = vadd.f32 %v1716, %v45
  %v1721 = vadd.f32 %v1717, %v46
  %v1722 = vadd.f32 %v1718, %v47
  %vm1723 = vcmp.ge.f32.partialorder %v1719, 0.0
  %vm1724 = vcmp.ge.f32.partialorder %v1720, 0.0
  %vm1725 = vcmp.ge.f32.partialorder %v1721, 0.0
  %vm1726 = vcmp.ge.f32.partialorder %v1722, 0.0
  %v1727 = vmul.f32 %v1719, 0.01
  %v1728 = vmul.f32 %v1720, 0.01
  %v1729 = vmul.f32 %v1721, 0.01
  %v1730 = vmul.f32 %v1722, 0.01
  %v1731 = vsel %vm1723, %v1719, %v1727
  %v1732 = vsel %vm1724, %v1720, %v1728
  %v1733 = vsel %vm1725, %v1721, %v1729
  %v1734 = vsel %vm1726, %v1722, %v1730
  %v1735 = vsel %vm120, %v1731, 0.0
  %v1736 = vsel %vm120, %v1732, 0.0
  %v1737 = vadd.f32 %v1735, %v1736
  %v1738 = vsel %vm120, %v1733, 0.0
  %v1739 = vadd.f32 %v1737, %v1738
  %v1740 = vsel %vm120, %v1734, 0.0
  %v1741 = vadd.f32 %v1739, %v1740
  %v1742 = vrot.slane %v1741, 4
  %v1743 = vadd.f32 %v1741, %v1742
  %v1744 = vrot.slane %v1743, 2
  %v1745 = vadd.f32 %v1743, %v1744
  %v1746 = vrot.slane %v1745, 1
  %v1747 = vadd.f32 %v1745, %v1746
  %v1748 = vmul.f32 %v1747, 0.03125
  %vm1749 = vcmask 253952
  %1750 = vst.msk [vmem:[%s5] sm:$0x1] %vm1749, %v1748
  // Predicated region
  $region22: #{smha_classifier_forward.1} parent=0 // pred_check
    _
  $region23: #{smha_classifier_forward.1} parent=0 // pred_check_branch
    %1752 = sbr.rel (0) target = $region25
  $region24: #{smha_classifier_forward.1} parent=0 // pred_region
    _
  $region25: #{smha_classifier_forward.1} parent=0 // pred_fallthru
    _
  // Predicated region
  $region26: #{smha_classifier_forward.1} parent=0 // pred_check
    _
  $region27: #{smha_classifier_forward.1} parent=0 // pred_check_branch
    %1754 = sbr.rel (0) target = $region29
  $region28: #{smha_classifier_forward.1} parent=0 // pred_region
    _
  $region29: #{smha_classifier_forward.1} parent=0 // pred_fallthru
    _

</llo_original>
